<compile_context>
chip_gen: v7x
topology: tpu7x:2x2x1
jax: 0.10.0
libtpu: 0.0.40
codegen_flags: <defaults>
</compile_context>

<pallas_src>
import jax
import jax.numpy as jnp
from jax.experimental import pallas as pl
from jax.experimental.pallas import tpu as pltpu

MAX_VIDEO_LEN = 32  # self.max_video_len


# ----------------------------------------------------------------------------
# Fused kernel: encoder matmul (+folded normalization bias) -> masked mean pool
#               -> projection -> L2-normalize -> cosine score vs. target.
#   clips:  [sec, K] f32   (channels-last flatten of the raw video clip)
#   w_enc:  [K, D]  bf16   (normalization + channel-permute folded in)
#   b_enc:  [1, D]  f32    (folded -(mean/std)·W bias)
#   w_clip: [D, D]  f32
#   tgt:    [1, D]  f32    (pre-normalized target embedding)
# ----------------------------------------------------------------------------
def clip_embed_kernel(clips_ref, w_enc_ref, b_enc_ref, w_clip_ref, tgt_ref,
                      emb_ref, score_ref):
    # Half-precision encoder compute (mirrors torch .to(float16) under autocast),
    # f32 accumulation on the MXU.
    clips = clips_ref[...].astype(jnp.bfloat16)                      # [sec, K]
    vfeats = jnp.dot(clips, w_enc_ref[...],
                     preferred_element_type=jnp.float32)             # [sec, D]
    vfeats = vfeats + b_enc_ref[...]                                 # folded normalize

    # Masked mean pool over the padded max_video_len sequence: the padding rows
    # are zero and the mask covers exactly `sec` rows, so this equals a mean over
    # the `sec` encoded clips. Done as an MXU matmul (keeps it off the XLU).
    sec = vfeats.shape[0]
    ones = jnp.ones((1, sec), jnp.float32)
    pooled = jnp.dot(ones, vfeats,
                     preferred_element_type=jnp.float32) * (1.0 / sec)  # [1, D]

    # TODO(synk): the real VideoCLIP transformer head is opaque; modeled as a
    #             linear projection -> L2-normalize -> cosine score vs. target.
    proj = jnp.dot(pooled, w_clip_ref[...],
                   preferred_element_type=jnp.float32)               # [1, D]
    proj_n = proj * jax.lax.rsqrt(
        jnp.sum(proj * proj, axis=1, keepdims=True) + 1e-6)

    emb_ref[...] = proj_n
    score_ref[...] = jnp.sum(proj_n * tgt_ref[...], axis=1, keepdims=True)


# ----------------------------------------------------------------------------
# One-time parameter preparation (done at "model load" time, not per forward):
#   * fold the per-channel (x - mean) / std into the encoder weight + a bias,
#   * permute weight rows so the activations can use a free channels-last
#     flatten instead of an NCTHW transpose,
#   * pre-normalize the target embedding.
# ----------------------------------------------------------------------------
def prepare_params(w_enc_cf, mean, std, w_clip, target, *, C, fps, H, W):
    inv_std = (1.0 / std).reshape(C)
    mean = mean.reshape(C)
    S = fps * H * W
    D = w_enc_cf.shape[-1]

    # w_enc_cf rows are ordered channels-first: k = c*(fps*H*W) + s
    w_view = w_enc_cf.astype(jnp.float32).reshape(C, S, D)
    w_scaled = w_view * inv_std.reshape(C, 1, 1)
    # bias[d] = -sum_{c,s} mean[c]*inv_std[c] * w[c,s,d]
    b_enc = -jnp.einsum("c,csd->d", mean * inv_std, w_view).reshape(1, D)
    # reorder rows to match channels-last flatten: k_cl = s*C + c
    w_enc_cl = jnp.transpose(w_scaled, (1, 0, 2)).reshape(S * C, D)

    tgt = target.reshape(1, D).astype(jnp.float32)
    tgt_n = tgt * jax.lax.rsqrt(jnp.sum(tgt * tgt, axis=1, keepdims=True) + 1e-6)

    return {
        "w_enc_cl": w_enc_cl.astype(jnp.bfloat16),
        "b_enc": b_enc.astype(jnp.float32),
        "w_clip": w_clip.astype(jnp.float32),
        "target_n": tgt_n,
    }


# ----------------------------------------------------------------------------
# Forward pass mirroring CLIPEmbed.forward / process_video
# ----------------------------------------------------------------------------
@jax.jit
def clip_embed_forward(x, params):
    # x: [bsz, sec, fps, H, W, C] float32 (the 6-D branch of forward())
    bsz, sec, fps, H, W, C = x.shape
    assert bsz == 1, "only bsz=1 is supported now."  # mirrors process_video assert
    assert sec <= MAX_VIDEO_LEN

    # The torch reshape/permute chain (NCTHW), the S3D normalize, and the fp16
    # cast are all folded into prepare_params / the kernel, so the activation
    # path is a single zero-copy reshape to a channels-last flatten.
    # TODO(synk): bilinear resize to 224x224 from the S3D transform has no clean
    #             Pallas equivalent here; spatial size is kept at (H, W).
    clips = x.reshape(sec, fps * H * W * C)                      # [sec, K] f32

    D = params["w_enc_cl"].shape[-1]
    emb, score = pl.pallas_call(
        clip_embed_kernel,
        out_shape=(
            jax.ShapeDtypeStruct((1, D), jnp.float32),
            jax.ShapeDtypeStruct((1, 1), jnp.float32),
        ),
        in_specs=[pl.BlockSpec(memory_space=pltpu.MemorySpace.VMEM)] * 5,
        out_specs=(
            pl.BlockSpec(memory_space=pltpu.MemorySpace.VMEM),
            pl.BlockSpec(memory_space=pltpu.MemorySpace.VMEM),
        ),
    )(clips, params["w_enc_cl"], params["b_enc"],
      params["w_clip"], params["target_n"])
    return emb, score


# ----------------------------------------------------------------------------
if __name__ == "__main__":
    bsz, sec, fps, H, W, C = 1, 8, 4, 16, 16, 3
    D = 128
    K_in = C * fps * H * W  # 3072

    key = jax.random.PRNGKey(0)
    k_x, k_enc, k_clip, k_tgt = jax.random.split(key, 4)

    x = jax.random.uniform(k_x, (bsz, sec, fps, H, W, C), dtype=jnp.float32)

    # Kinetics-400 normalization constants used by S3D_Weights.KINETICS400_V1
    mean = jnp.array([0.43216, 0.394666, 0.37645], jnp.float32)
    std = jnp.array([0.22803, 0.22145, 0.216989], jnp.float32)

    # TODO(synk): the real video_encoder is an S3D 3-D conv net and clip_model is
    #             a VideoCLIP transformer; both are replaced by deterministic
    #             linear projections (same I/O shapes, same control flow).
    w_enc_cf = jax.random.normal(k_enc, (K_in, D), jnp.float32) / jnp.sqrt(K_in)
    w_clip = jax.random.normal(k_clip, (D, D), jnp.float32) / jnp.sqrt(D)
    target = jax.random.normal(k_tgt, (1, D), jnp.float32)

    params = prepare_params(w_enc_cf, mean, std, w_clip, target,
                            C=C, fps=fps, H=H, W=W)

    emb, score = clip_embed_forward(x, params)
    jax.block_until_ready((emb, score))
    assert emb.shape == (1, D) and score.shape == (1, 1)
    print("KERNEL_OK")
</pallas_src>

<mosaic_0001>
module attributes {stable_mosaic.version = 11 : i64} {
  func.func @clip_embed_kernel(%arg0: memref<8x3072xf32, #tpu.memory_space<vmem>>, %arg1: memref<3072x128xbf16, #tpu.memory_space<vmem>>, %arg2: memref<1x128xf32, #tpu.memory_space<vmem>>, %arg3: memref<128x128xf32, #tpu.memory_space<vmem>>, %arg4: memref<1x128xf32, #tpu.memory_space<vmem>>, %arg5: memref<1x128xf32, #tpu.memory_space<vmem>>, %arg6: memref<1x1xf32, #tpu.memory_space<vmem>>) attributes {dimension_semantics = [], scalar_prefetch = 0 : i64, scratch_operands = 0 : i64, tpu.core_type = #tpu.core_type<tc>} {
    %c0 = arith.constant 0 : index
    %c0_0 = arith.constant 0 : index
    %0 = vector.load %arg0[%c0, %c0_0] : memref<8x3072xf32, #tpu.memory_space<vmem>>, vector<8x3072xf32>
    %1 = arith.truncf %0 : vector<8x3072xf32> to vector<8x3072xbf16>
    %c0_1 = arith.constant 0 : index
    %c0_2 = arith.constant 0 : index
    %2 = vector.load %arg1[%c0_1, %c0_2] : memref<3072x128xbf16, #tpu.memory_space<vmem>>, vector<3072x128xbf16>
    %cst = arith.constant dense<0.000000e+00> : vector<8x128xf32>
    %3 = tpu.matmul %1, %2, %cst {dimension_numbers = #tpu.dot_dimension_numbers<[1], [0], [0], [1], [0, 0, 1, 1], [], []>} : vector<8x3072xbf16>, vector<3072x128xbf16>, vector<8x128xf32> -> vector<8x128xf32>
    %c0_3 = arith.constant 0 : index
    %c0_4 = arith.constant 0 : index
    %4 = vector.load %arg2[%c0_3, %c0_4] : memref<1x128xf32, #tpu.memory_space<vmem>>, vector<1x128xf32>
    %5 = vector.broadcast %4 : vector<1x128xf32> to vector<8x128xf32>
    %6 = arith.addf %3, %5 : vector<8x128xf32>
    %cst_5 = arith.constant 1.000000e+00 : f32
    %7 = vector.broadcast %cst_5 : f32 to vector<1x8xf32>
    %cst_6 = arith.constant dense<0.000000e+00> : vector<1x128xf32>
    %8 = tpu.matmul %7, %6, %cst_6 {dimension_numbers = #tpu.dot_dimension_numbers<[1], [0], [0], [1], [0, 0, 1, 1], [], []>} : vector<1x8xf32>, vector<8x128xf32>, vector<1x128xf32> -> vector<1x128xf32>
    %cst_7 = arith.constant 1.250000e-01 : f32
    %9 = vector.broadcast %cst_7 : f32 to vector<1x128xf32>
    %10 = arith.mulf %8, %9 : vector<1x128xf32>
    %c0_8 = arith.constant 0 : index
    %c0_9 = arith.constant 0 : index
    %11 = vector.load %arg3[%c0_8, %c0_9] : memref<128x128xf32, #tpu.memory_space<vmem>>, vector<128x128xf32>
    %cst_10 = arith.constant dense<0.000000e+00> : vector<1x128xf32>
    %12 = tpu.matmul %10, %11, %cst_10 {dimension_numbers = #tpu.dot_dimension_numbers<[1], [0], [0], [1], [0, 0, 1, 1], [], []>} : vector<1x128xf32>, vector<128x128xf32>, vector<1x128xf32> -> vector<1x128xf32>
    %13 = arith.mulf %12, %12 : vector<1x128xf32>
    %cst_11 = arith.constant dense<0.000000e+00> : vector<1xf32>
    %14 = vector.multi_reduction <add>, %13, %cst_11 [1] : vector<1x128xf32> to vector<1xf32>
    %15 = vector.shape_cast %14 : vector<1xf32> to vector<1x1xf32>
    %cst_12 = arith.constant 9.99999997E-7 : f32
    %16 = vector.broadcast %cst_12 : f32 to vector<1x1xf32>
    %17 = arith.addf %15, %16 : vector<1x1xf32>
    %18 = math.rsqrt %17 : vector<1x1xf32>
    %19 = vector.broadcast %18 : vector<1x1xf32> to vector<1x128xf32>
    %20 = arith.mulf %12, %19 : vector<1x128xf32>
    %c0_13 = arith.constant 0 : index
    %c0_14 = arith.constant 0 : index
    %21 = vector.load %arg5[%c0_13, %c0_14] : memref<1x128xf32, #tpu.memory_space<vmem>>, vector<1x128xf32>
    tpu.vector_store %arg5[%c0_13, %c0_14], %20 {strides = array<i32>} : memref<1x128xf32, #tpu.memory_space<vmem>>, vector<1x128xf32>,
    %c0_15 = arith.constant 0 : index
    %c0_16 = arith.constant 0 : index
    %22 = vector.load %arg4[%c0_15, %c0_16] : memref<1x128xf32, #tpu.memory_space<vmem>>, vector<1x128xf32>
    %23 = arith.mulf %20, %22 : vector<1x128xf32>
    %cst_17 = arith.constant dense<0.000000e+00> : vector<1xf32>
    %24 = vector.multi_reduction <add>, %23, %cst_17 [1] : vector<1x128xf32> to vector<1xf32>
    %25 = vector.shape_cast %24 : vector<1xf32> to vector<1x1xf32>
    %c0_18 = arith.constant 0 : index
    %c0_19 = arith.constant 0 : index
    %26 = vector.load %arg6[%c0_18, %c0_19] : memref<1x1xf32, #tpu.memory_space<vmem>>, vector<1x1xf32>
    tpu.vector_store %arg6[%c0_18, %c0_19], %25 {strides = array<i32>} : memref<1x1xf32, #tpu.memory_space<vmem>>, vector<1x1xf32>,
    return
  }
}

</mosaic_0001>

<llo_original>
// kernel: clip_embed_forward.1
$region0: #{clip_embed_forward.1}
  #allocation0 [shape = 'u32[]', space=smem, size = 0x4, offset = 0x4, fixed_abs, tag = 'smem constant byte address 0x4 - core index']
  #allocation1 [shape = 'u32[144,128]{1,0:T(1,128)}', space=vmem, size = 0x12000, scoped, tag = 'internal scratch']
  %s0 = inlined_call_operand.vmem [shape: f32[8,3072], index: 0, kind: input, shape index: {}]
  %s1 = inlined_call_operand.vmem [shape: bf16[3072,128], index: 1, kind: input, shape index: {}]
  %s2 = inlined_call_operand.vmem [shape: f32[1,128], index: 2, kind: input, shape index: {}]
  %s3 = inlined_call_operand.vmem [shape: f32[128,128], index: 3, kind: input, shape index: {}]
  %s4 = inlined_call_operand.vmem [shape: f32[1,128], index: 4, kind: input, shape index: {}]
  %s5 = inlined_call_operand.hbm [shape: f32[1,128], index: 5, kind: output, shape index: {0}]
  %s6 = inlined_call_operand.hbm [shape: f32[1,1], index: 6, kind: output, shape index: {1}]
  %7 = xla_tuple %s5, %s6
  %s8 = sld [smem:[#allocation0]]
  $region38: #{clip_embed_forward.1} parent=0
    _
  %s10 = ssub.s32 1, %s8
  %s11 = scalar_select 0, %s10, %s8
  $region1: #{clip_embed_forward.1} parent=0
    #allocation2 [shape = 'u8[512]{0}', space=vmem, size = 0x400, scoped, tag = 'output window, operand 0, single buffered']
    #allocation3 [shape = 's32[1]{0}', space=sflag, size = 0x4, scoped, tag = 'scoped memory for clip_embed_forward.1']
    #allocation4 [shape = 'u8[512]{0}', space=vmem, size = 0x400, scoped, tag = 'output window, operand 1, single buffered']
    #allocation5 [shape = 's32[1]{0}', space=sflag, size = 0x4, scoped, tag = 'scoped memory for clip_embed_forward.1']
    %12 = vsyncpa [#allocation3], 0
    %13 = vsyncpa [#allocation5], 0
    // Predicated region
    $region2: #{clip_embed_forward.1} parent=1 // pred_check
      _
    $region3: #{clip_embed_forward.1} parent=1 // pred_check_branch
      %15 = sbr.rel (0) target = $region5
    $region4: #{clip_embed_forward.1} parent=1 // pred_region
      _
    $region5: #{clip_embed_forward.1} parent=1 // pred_fallthru
      _
    // Predicated region
    $region6: #{clip_embed_forward.1} parent=1 // pred_check
      _
    $region7: #{clip_embed_forward.1} parent=1 // pred_check_branch
      %17 = sbr.rel (0) target = $region9
    $region8: #{clip_embed_forward.1} parent=1 // pred_region
      _
    $region9: #{clip_embed_forward.1} parent=1 // pred_fallthru
      _
    // Predicated region
    $region10: #{clip_embed_forward.1} parent=1 // pred_check
      _
    $region11: #{clip_embed_forward.1} parent=1 // pred_check_branch
      %19 = sbr.rel (0) target = $region13
    $region12: #{clip_embed_forward.1} parent=1 // pred_region
      _
    $region13: #{clip_embed_forward.1} parent=1 // pred_fallthru
      _
    // Predicated region
    $region14: #{clip_embed_forward.1} parent=1 // pred_check
      _
    $region15: #{clip_embed_forward.1} parent=1 // pred_check_branch
      %21 = sbr.rel (0) target = $region17
    $region16: #{clip_embed_forward.1} parent=1 // pred_region
      _
    $region17: #{clip_embed_forward.1} parent=1 // pred_fallthru
      _
    // Predicated region
    $region18: #{clip_embed_forward.1} parent=1 // pred_check
      _
    $region19: #{clip_embed_forward.1} parent=1 // pred_check_branch
      %23 = sbr.rel (0) target = $region21
    $region20: #{clip_embed_forward.1} parent=1 // pred_region
      _
    $region21: #{clip_embed_forward.1} parent=1 // pred_fallthru
      _
    %v25 = vld [vmem:[%s0] sm:$0xff]
    %v26 = vld [vmem:[%s0 + $0x8] sm:$0xff]
    %v27 = vld [vmem:[%s0 + $0x10] sm:$0xff]
    %v28 = vld [vmem:[%s0 + $0x18] sm:$0xff]
    %v29 = vld [vmem:[%s0 + $0x20] sm:$0xff]
    %v30 = vld [vmem:[%s0 + $0x28] sm:$0xff]
    %v31 = vld [vmem:[%s0 + $0x30] sm:$0xff]
    %v32 = vld [vmem:[%s0 + $0x38] sm:$0xff]
    %v33 = vld [vmem:[%s0 + $0x40] sm:$0xff]
    %v34 = vld [vmem:[%s0 + $0x48] sm:$0xff]
    %v35 = vld [vmem:[%s0 + $0x50] sm:$0xff]
    %v36 = vld [vmem:[%s0 + $0x58] sm:$0xff]
    %v37 = vld [vmem:[%s0 + $0x60] sm:$0xff]
    %v38 = vld [vmem:[%s0 + $0x68] sm:$0xff]
    %v39 = vld [vmem:[%s0 + $0x70] sm:$0xff]
    %v40 = vld [vmem:[%s0 + $0x78] sm:$0xff]
    %v41 = vld [vmem:[%s0 + $0x80] sm:$0xff]
    %v42 = vld [vmem:[%s0 + $0x88] sm:$0xff]
    %v43 = vld [vmem:[%s0 + $0x90] sm:$0xff]
    %v44 = vld [vmem:[%s0 + $0x98] sm:$0xff]
    %v45 = vld [vmem:[%s0 + $0xa0] sm:$0xff]
    %v46 = vld [vmem:[%s0 + $0xa8] sm:$0xff]
    %v47 = vld [vmem:[%s0 + $0xb0] sm:$0xff]
    %v48 = vld [vmem:[%s0 + $0xb8] sm:$0xff]
    %v49 = vpack.c.bf16 %v25, %v25
    %v50 = vpack.c.bf16 %v26, %v26
    %v51 = vpack.c.bf16 %v27, %v27
    %v52 = vpack.c.bf16 %v28, %v28
    %v53 = vpack.c.bf16 %v29, %v29
    %v54 = vpack.c.bf16 %v30, %v30
    %v55 = vpack.c.bf16 %v31, %v31
    %v56 = vpack.c.bf16 %v32, %v32
    %v57 = vpack.c.bf16 %v33, %v33
    %v58 = vpack.c.bf16 %v34, %v34
    %v59 = vpack.c.bf16 %v35, %v35
    %v60 = vpack.c.bf16 %v36, %v36
    %v61 = vpack.c.bf16 %v37, %v37
    %v62 = vpack.c.bf16 %v38, %v38
    %v63 = vpack.c.bf16 %v39, %v39
    %v64 = vpack.c.bf16 %v40, %v40
    %v65 = vpack.c.bf16 %v41, %v41
    %v66 = vpack.c.bf16 %v42, %v42
    %v67 = vpack.c.bf16 %v43, %v43
    %v68 = vpack.c.bf16 %v44, %v44
    %v69 = vpack.c.bf16 %v45, %v45
    %v70 = vpack.c.bf16 %v46, %v46
    %v71 = vpack.c.bf16 %v47, %v47
    %v72 = vpack.c.bf16 %v48, %v48
    %v73 = vld [vmem:[%s1] sm:$0xf]
    %v74 = vld [vmem:[%s1 + $0x4] sm:$0xf]
    %v75 = vld [vmem:[%s1 + $0x8] sm:$0xf]
    %v76 = vld [vmem:[%s1 + $0xc] sm:$0xf]
    %v77 = vld [vmem:[%s1 + $0x10] sm:$0xf]
    %v78 = vld [vmem:[%s1 + $0x14] sm:$0xf]
    %v79 = vld [vmem:[%s1 + $0x18] sm:$0xf]
    %v80 = vld [vmem:[%s1 + $0x1c] sm:$0xf]
    %v81 = vld [vmem:[%s1 + $0x20] sm:$0xf]
    %v82 = vld [vmem:[%s1 + $0x24] sm:$0xf]
    %v83 = vld [vmem:[%s1 + $0x28] sm:$0xf]
    %v84 = vld [vmem:[%s1 + $0x2c] sm:$0xf]
    %v85 = vld [vmem:[%s1 + $0x30] sm:$0xf]
    %v86 = vld [vmem:[%s1 + $0x34] sm:$0xf]
    %v87 = vld [vmem:[%s1 + $0x38] sm:$0xf]
    %v88 = vld [vmem:[%s1 + $0x3c] sm:$0xf]
    %v89 = vld [vmem:[%s1 + $0x40] sm:$0xf]
    %v90 = vld [vmem:[%s1 + $0x44] sm:$0xf]
    %v91 = vld [vmem:[%s1 + $0x48] sm:$0xf]
    %v92 = vld [vmem:[%s1 + $0x4c] sm:$0xf]
    %v93 = vld [vmem:[%s1 + $0x50] sm:$0xf]
    %v94 = vld [vmem:[%s1 + $0x54] sm:$0xf]
    %v95 = vld [vmem:[%s1 + $0x58] sm:$0xf]
    %v96 = vld [vmem:[%s1 + $0x5c] sm:$0xf]
    %v97 = vld [vmem:[%s1 + $0x60] sm:$0xf]
    %v98 = vld [vmem:[%s1 + $0x64] sm:$0xf]
    %v99 = vld [vmem:[%s1 + $0x68] sm:$0xf]
    %v100 = vld [vmem:[%s1 + $0x6c] sm:$0xf]
    %v101 = vld [vmem:[%s1 + $0x70] sm:$0xf]
    %v102 = vld [vmem:[%s1 + $0x74] sm:$0xf]
    %v103 = vld [vmem:[%s1 + $0x78] sm:$0xf]
    %v104 = vld [vmem:[%s1 + $0x7c] sm:$0xf]
    %v105 = vld [vmem:[%s1 + $0x80] sm:$0xf]
    %v106 = vld [vmem:[%s1 + $0x84] sm:$0xf]
    %v107 = vld [vmem:[%s1 + $0x88] sm:$0xf]
    %v108 = vld [vmem:[%s1 + $0x8c] sm:$0xf]
    %v109 = vld [vmem:[%s1 + $0x90] sm:$0xf]
    %v110 = vld [vmem:[%s1 + $0x94] sm:$0xf]
    %v111 = vld [vmem:[%s1 + $0x98] sm:$0xf]
    %v112 = vld [vmem:[%s1 + $0x9c] sm:$0xf]
    %v113 = vld [vmem:[%s1 + $0xa0] sm:$0xf]
    %v114 = vld [vmem:[%s1 + $0xa4] sm:$0xf]
    %v115 = vld [vmem:[%s1 + $0xa8] sm:$0xf]
    %v116 = vld [vmem:[%s1 + $0xac] sm:$0xf]
    %v117 = vld [vmem:[%s1 + $0xb0] sm:$0xf]
    %v118 = vld [vmem:[%s1 + $0xb4] sm:$0xf]
    %v119 = vld [vmem:[%s1 + $0xb8] sm:$0xf]
    %v120 = vld [vmem:[%s1 + $0xbc] sm:$0xf]
    %v121 = vld [vmem:[%s1 + $0xc0] sm:$0xf]
    %v122 = vld [vmem:[%s1 + $0xc4] sm:$0xf]
    %v123 = vld [vmem:[%s1 + $0xc8] sm:$0xf]
    %v124 = vld [vmem:[%s1 + $0xcc] sm:$0xf]
    %v125 = vld [vmem:[%s1 + $0xd0] sm:$0xf]
    %v126 = vld [vmem:[%s1 + $0xd4] sm:$0xf]
    %v127 = vld [vmem:[%s1 + $0xd8] sm:$0xf]
    %v128 = vld [vmem:[%s1 + $0xdc] sm:$0xf]
    %v129 = vld [vmem:[%s1 + $0xe0] sm:$0xf]
    %v130 = vld [vmem:[%s1 + $0xe4] sm:$0xf]
    %v131 = vld [vmem:[%s1 + $0xe8] sm:$0xf]
    %v132 = vld [vmem:[%s1 + $0xec] sm:$0xf]
    %v133 = vld [vmem:[%s1 + $0xf0] sm:$0xf]
    %v134 = vld [vmem:[%s1 + $0xf4] sm:$0xf]
    %v135 = vld [vmem:[%s1 + $0xf8] sm:$0xf]
    %v136 = vld [vmem:[%s1 + $0xfc] sm:$0xf]
    %v137 = vld [vmem:[%s1 + $0x100] sm:$0xf]
    %v138 = vld [vmem:[%s1 + $0x104] sm:$0xf]
    %v139 = vld [vmem:[%s1 + $0x108] sm:$0xf]
    %v140 = vld [vmem:[%s1 + $0x10c] sm:$0xf]
    %v141 = vld [vmem:[%s1 + $0x110] sm:$0xf]
    %v142 = vld [vmem:[%s1 + $0x114] sm:$0xf]
    %v143 = vld [vmem:[%s1 + $0x118] sm:$0xf]
    %v144 = vld [vmem:[%s1 + $0x11c] sm:$0xf]
    %v145 = vld [vmem:[%s1 + $0x120] sm:$0xf]
    %v146 = vld [vmem:[%s1 + $0x124] sm:$0xf]
    %v147 = vld [vmem:[%s1 + $0x128] sm:$0xf]
    %v148 = vld [vmem:[%s1 + $0x12c] sm:$0xf]
    %v149 = vld [vmem:[%s1 + $0x130] sm:$0xf]
    %v150 = vld [vmem:[%s1 + $0x134] sm:$0xf]
    %v151 = vld [vmem:[%s1 + $0x138] sm:$0xf]
    %v152 = vld [vmem:[%s1 + $0x13c] sm:$0xf]
    %v153 = vld [vmem:[%s1 + $0x140] sm:$0xf]
    %v154 = vld [vmem:[%s1 + $0x144] sm:$0xf]
    %v155 = vld [vmem:[%s1 + $0x148] sm:$0xf]
    %v156 = vld [vmem:[%s1 + $0x14c] sm:$0xf]
    %v157 = vld [vmem:[%s1 + $0x150] sm:$0xf]
    %v158 = vld [vmem:[%s1 + $0x154] sm:$0xf]
    %v159 = vld [vmem:[%s1 + $0x158] sm:$0xf]
    %v160 = vld [vmem:[%s1 + $0x15c] sm:$0xf]
    %v161 = vld [vmem:[%s1 + $0x160] sm:$0xf]
    %v162 = vld [vmem:[%s1 + $0x164] sm:$0xf]
    %v163 = vld [vmem:[%s1 + $0x168] sm:$0xf]
    %v164 = vld [vmem:[%s1 + $0x16c] sm:$0xf]
    %v165 = vld [vmem:[%s1 + $0x170] sm:$0xf]
    %v166 = vld [vmem:[%s1 + $0x174] sm:$0xf]
    %v167 = vld [vmem:[%s1 + $0x178] sm:$0xf]
    %v168 = vld [vmem:[%s1 + $0x17c] sm:$0xf]
    %v169 = vld [vmem:[%s1 + $0x180] sm:$0xf]
    %v170 = vld [vmem:[%s1 + $0x184] sm:$0xf]
    %v171 = vld [vmem:[%s1 + $0x188] sm:$0xf]
    %v172 = vld [vmem:[%s1 + $0x18c] sm:$0xf]
    %v173 = vld [vmem:[%s1 + $0x190] sm:$0xf]
    %v174 = vld [vmem:[%s1 + $0x194] sm:$0xf]
    %v175 = vld [vmem:[%s1 + $0x198] sm:$0xf]
    %v176 = vld [vmem:[%s1 + $0x19c] sm:$0xf]
    %v177 = vld [vmem:[%s1 + $0x1a0] sm:$0xf]
    %v178 = vld [vmem:[%s1 + $0x1a4] sm:$0xf]
    %v179 = vld [vmem:[%s1 + $0x1a8] sm:$0xf]
    %v180 = vld [vmem:[%s1 + $0x1ac] sm:$0xf]
    %v181 = vld [vmem:[%s1 + $0x1b0] sm:$0xf]
    %v182 = vld [vmem:[%s1 + $0x1b4] sm:$0xf]
    %v183 = vld [vmem:[%s1 + $0x1b8] sm:$0xf]
    %v184 = vld [vmem:[%s1 + $0x1bc] sm:$0xf]
    %v185 = vld [vmem:[%s1 + $0x1c0] sm:$0xf]
    %v186 = vld [vmem:[%s1 + $0x1c4] sm:$0xf]
    %v187 = vld [vmem:[%s1 + $0x1c8] sm:$0xf]
    %v188 = vld [vmem:[%s1 + $0x1cc] sm:$0xf]
    %v189 = vld [vmem:[%s1 + $0x1d0] sm:$0xf]
    %v190 = vld [vmem:[%s1 + $0x1d4] sm:$0xf]
    %v191 = vld [vmem:[%s1 + $0x1d8] sm:$0xf]
    %v192 = vld [vmem:[%s1 + $0x1dc] sm:$0xf]
    %v193 = vld [vmem:[%s1 + $0x1e0] sm:$0xf]
    %v194 = vld [vmem:[%s1 + $0x1e4] sm:$0xf]
    %v195 = vld [vmem:[%s1 + $0x1e8] sm:$0xf]
    %v196 = vld [vmem:[%s1 + $0x1ec] sm:$0xf]
    %v197 = vld [vmem:[%s1 + $0x1f0] sm:$0xf]
    %v198 = vld [vmem:[%s1 + $0x1f4] sm:$0xf]
    %v199 = vld [vmem:[%s1 + $0x1f8] sm:$0xf]
    %v200 = vld [vmem:[%s1 + $0x1fc] sm:$0xf]
    %v201 = vld [vmem:[%s1 + $0x200] sm:$0xf]
    %v202 = vld [vmem:[%s1 + $0x204] sm:$0xf]
    %v203 = vld [vmem:[%s1 + $0x208] sm:$0xf]
    %v204 = vld [vmem:[%s1 + $0x20c] sm:$0xf]
    %v205 = vld [vmem:[%s1 + $0x210] sm:$0xf]
    %v206 = vld [vmem:[%s1 + $0x214] sm:$0xf]
    %v207 = vld [vmem:[%s1 + $0x218] sm:$0xf]
    %v208 = vld [vmem:[%s1 + $0x21c] sm:$0xf]
    %v209 = vld [vmem:[%s1 + $0x220] sm:$0xf]
    %v210 = vld [vmem:[%s1 + $0x224] sm:$0xf]
    %v211 = vld [vmem:[%s1 + $0x228] sm:$0xf]
    %v212 = vld [vmem:[%s1 + $0x22c] sm:$0xf]
    %v213 = vld [vmem:[%s1 + $0x230] sm:$0xf]
    %v214 = vld [vmem:[%s1 + $0x234] sm:$0xf]
    %v215 = vld [vmem:[%s1 + $0x238] sm:$0xf]
    %v216 = vld [vmem:[%s1 + $0x23c] sm:$0xf]
    %v217 = vld [vmem:[%s1 + $0x240] sm:$0xf]
    %v218 = vld [vmem:[%s1 + $0x244] sm:$0xf]
    %v219 = vld [vmem:[%s1 + $0x248] sm:$0xf]
    %v220 = vld [vmem:[%s1 + $0x24c] sm:$0xf]
    %v221 = vld [vmem:[%s1 + $0x250] sm:$0xf]
    %v222 = vld [vmem:[%s1 + $0x254] sm:$0xf]
    %v223 = vld [vmem:[%s1 + $0x258] sm:$0xf]
    %v224 = vld [vmem:[%s1 + $0x25c] sm:$0xf]
    %v225 = vld [vmem:[%s1 + $0x260] sm:$0xf]
    %v226 = vld [vmem:[%s1 + $0x264] sm:$0xf]
    %v227 = vld [vmem:[%s1 + $0x268] sm:$0xf]
    %v228 = vld [vmem:[%s1 + $0x26c] sm:$0xf]
    %v229 = vld [vmem:[%s1 + $0x270] sm:$0xf]
    %v230 = vld [vmem:[%s1 + $0x274] sm:$0xf]
    %v231 = vld [vmem:[%s1 + $0x278] sm:$0xf]
    %v232 = vld [vmem:[%s1 + $0x27c] sm:$0xf]
    %v233 = vld [vmem:[%s1 + $0x280] sm:$0xf]
    %v234 = vld [vmem:[%s1 + $0x284] sm:$0xf]
    %v235 = vld [vmem:[%s1 + $0x288] sm:$0xf]
    %v236 = vld [vmem:[%s1 + $0x28c] sm:$0xf]
    %v237 = vld [vmem:[%s1 + $0x290] sm:$0xf]
    %v238 = vld [vmem:[%s1 + $0x294] sm:$0xf]
    %v239 = vld [vmem:[%s1 + $0x298] sm:$0xf]
    %v240 = vld [vmem:[%s1 + $0x29c] sm:$0xf]
    %v241 = vld [vmem:[%s1 + $0x2a0] sm:$0xf]
    %v242 = vld [vmem:[%s1 + $0x2a4] sm:$0xf]
    %v243 = vld [vmem:[%s1 + $0x2a8] sm:$0xf]
    %v244 = vld [vmem:[%s1 + $0x2ac] sm:$0xf]
    %v245 = vld [vmem:[%s1 + $0x2b0] sm:$0xf]
    %v246 = vld [vmem:[%s1 + $0x2b4] sm:$0xf]
    %v247 = vld [vmem:[%s1 + $0x2b8] sm:$0xf]
    %v248 = vld [vmem:[%s1 + $0x2bc] sm:$0xf]
    %v249 = vld [vmem:[%s1 + $0x2c0] sm:$0xf]
    %v250 = vld [vmem:[%s1 + $0x2c4] sm:$0xf]
    %v251 = vld [vmem:[%s1 + $0x2c8] sm:$0xf]
    %v252 = vld [vmem:[%s1 + $0x2cc] sm:$0xf]
    %v253 = vld [vmem:[%s1 + $0x2d0] sm:$0xf]
    %v254 = vld [vmem:[%s1 + $0x2d4] sm:$0xf]
    %v255 = vld [vmem:[%s1 + $0x2d8] sm:$0xf]
    %v256 = vld [vmem:[%s1 + $0x2dc] sm:$0xf]
    %v257 = vld [vmem:[%s1 + $0x2e0] sm:$0xf]
    %v258 = vld [vmem:[%s1 + $0x2e4] sm:$0xf]
    %v259 = vld [vmem:[%s1 + $0x2e8] sm:$0xf]
    %v260 = vld [vmem:[%s1 + $0x2ec] sm:$0xf]
    %v261 = vld [vmem:[%s1 + $0x2f0] sm:$0xf]
    %v262 = vld [vmem:[%s1 + $0x2f4] sm:$0xf]
    %v263 = vld [vmem:[%s1 + $0x2f8] sm:$0xf]
    %v264 = vld [vmem:[%s1 + $0x2fc] sm:$0xf]
    %v265 = vld [vmem:[%s1 + $0x300] sm:$0xf]
    %v266 = vld [vmem:[%s1 + $0x304] sm:$0xf]
    %v267 = vld [vmem:[%s1 + $0x308] sm:$0xf]
    %v268 = vld [vmem:[%s1 + $0x30c] sm:$0xf]
    %v269 = vld [vmem:[%s1 + $0x310] sm:$0xf]
    %v270 = vld [vmem:[%s1 + $0x314] sm:$0xf]
    %v271 = vld [vmem:[%s1 + $0x318] sm:$0xf]
    %v272 = vld [vmem:[%s1 + $0x31c] sm:$0xf]
    %v273 = vld [vmem:[%s1 + $0x320] sm:$0xf]
    %v274 = vld [vmem:[%s1 + $0x324] sm:$0xf]
    %v275 = vld [vmem:[%s1 + $0x328] sm:$0xf]
    %v276 = vld [vmem:[%s1 + $0x32c] sm:$0xf]
    %v277 = vld [vmem:[%s1 + $0x330] sm:$0xf]
    %v278 = vld [vmem:[%s1 + $0x334] sm:$0xf]
    %v279 = vld [vmem:[%s1 + $0x338] sm:$0xf]
    %v280 = vld [vmem:[%s1 + $0x33c] sm:$0xf]
    %v281 = vld [vmem:[%s1 + $0x340] sm:$0xf]
    %v282 = vld [vmem:[%s1 + $0x344] sm:$0xf]
    %v283 = vld [vmem:[%s1 + $0x348] sm:$0xf]
    %v284 = vld [vmem:[%s1 + $0x34c] sm:$0xf]
    %v285 = vld [vmem:[%s1 + $0x350] sm:$0xf]
    %v286 = vld [vmem:[%s1 + $0x354] sm:$0xf]
    %v287 = vld [vmem:[%s1 + $0x358] sm:$0xf]
    %v288 = vld [vmem:[%s1 + $0x35c] sm:$0xf]
    %v289 = vld [vmem:[%s1 + $0x360] sm:$0xf]
    %v290 = vld [vmem:[%s1 + $0x364] sm:$0xf]
    %v291 = vld [vmem:[%s1 + $0x368] sm:$0xf]
    %v292 = vld [vmem:[%s1 + $0x36c] sm:$0xf]
    %v293 = vld [vmem:[%s1 + $0x370] sm:$0xf]
    %v294 = vld [vmem:[%s1 + $0x374] sm:$0xf]
    %v295 = vld [vmem:[%s1 + $0x378] sm:$0xf]
    %v296 = vld [vmem:[%s1 + $0x37c] sm:$0xf]
    %v297 = vld [vmem:[%s1 + $0x380] sm:$0xf]
    %v298 = vld [vmem:[%s1 + $0x384] sm:$0xf]
    %v299 = vld [vmem:[%s1 + $0x388] sm:$0xf]
    %v300 = vld [vmem:[%s1 + $0x38c] sm:$0xf]
    %v301 = vld [vmem:[%s1 + $0x390] sm:$0xf]
    %v302 = vld [vmem:[%s1 + $0x394] sm:$0xf]
    %v303 = vld [vmem:[%s1 + $0x398] sm:$0xf]
    %v304 = vld [vmem:[%s1 + $0x39c] sm:$0xf]
    %v305 = vld [vmem:[%s1 + $0x3a0] sm:$0xf]
    %v306 = vld [vmem:[%s1 + $0x3a4] sm:$0xf]
    %v307 = vld [vmem:[%s1 + $0x3a8] sm:$0xf]
    %v308 = vld [vmem:[%s1 + $0x3ac] sm:$0xf]
    %v309 = vld [vmem:[%s1 + $0x3b0] sm:$0xf]
    %v310 = vld [vmem:[%s1 + $0x3b4] sm:$0xf]
    %v311 = vld [vmem:[%s1 + $0x3b8] sm:$0xf]
    %v312 = vld [vmem:[%s1 + $0x3bc] sm:$0xf]
    %v313 = vld [vmem:[%s1 + $0x3c0] sm:$0xf]
    %v314 = vld [vmem:[%s1 + $0x3c4] sm:$0xf]
    %v315 = vld [vmem:[%s1 + $0x3c8] sm:$0xf]
    %v316 = vld [vmem:[%s1 + $0x3cc] sm:$0xf]
    %v317 = vld [vmem:[%s1 + $0x3d0] sm:$0xf]
    %v318 = vld [vmem:[%s1 + $0x3d4] sm:$0xf]
    %v319 = vld [vmem:[%s1 + $0x3d8] sm:$0xf]
    %v320 = vld [vmem:[%s1 + $0x3dc] sm:$0xf]
    %v321 = vld [vmem:[%s1 + $0x3e0] sm:$0xf]
    %v322 = vld [vmem:[%s1 + $0x3e4] sm:$0xf]
    %v323 = vld [vmem:[%s1 + $0x3e8] sm:$0xf]
    %v324 = vld [vmem:[%s1 + $0x3ec] sm:$0xf]
    %v325 = vld [vmem:[%s1 + $0x3f0] sm:$0xf]
    %v326 = vld [vmem:[%s1 + $0x3f4] sm:$0xf]
    %v327 = vld [vmem:[%s1 + $0x3f8] sm:$0xf]
    %v328 = vld [vmem:[%s1 + $0x3fc] sm:$0xf]
    %v329 = vld [vmem:[%s1 + $0x400] sm:$0xf]
    %v330 = vld [vmem:[%s1 + $0x404] sm:$0xf]
    %v331 = vld [vmem:[%s1 + $0x408] sm:$0xf]
    %v332 = vld [vmem:[%s1 + $0x40c] sm:$0xf]
    %v333 = vld [vmem:[%s1 + $0x410] sm:$0xf]
    %v334 = vld [vmem:[%s1 + $0x414] sm:$0xf]
    %v335 = vld [vmem:[%s1 + $0x418] sm:$0xf]
    %v336 = vld [vmem:[%s1 + $0x41c] sm:$0xf]
    %v337 = vld [vmem:[%s1 + $0x420] sm:$0xf]
    %v338 = vld [vmem:[%s1 + $0x424] sm:$0xf]
    %v339 = vld [vmem:[%s1 + $0x428] sm:$0xf]
    %v340 = vld [vmem:[%s1 + $0x42c] sm:$0xf]
    %v341 = vld [vmem:[%s1 + $0x430] sm:$0xf]
    %v342 = vld [vmem:[%s1 + $0x434] sm:$0xf]
    %v343 = vld [vmem:[%s1 + $0x438] sm:$0xf]
    %v344 = vld [vmem:[%s1 + $0x43c] sm:$0xf]
    %v345 = vld [vmem:[%s1 + $0x440] sm:$0xf]
    %v346 = vld [vmem:[%s1 + $0x444] sm:$0xf]
    %v347 = vld [vmem:[%s1 + $0x448] sm:$0xf]
    %v348 = vld [vmem:[%s1 + $0x44c] sm:$0xf]
    %v349 = vld [vmem:[%s1 + $0x450] sm:$0xf]
    %v350 = vld [vmem:[%s1 + $0x454] sm:$0xf]
    %v351 = vld [vmem:[%s1 + $0x458] sm:$0xf]
    %v352 = vld [vmem:[%s1 + $0x45c] sm:$0xf]
    %v353 = vld [vmem:[%s1 + $0x460] sm:$0xf]
    %v354 = vld [vmem:[%s1 + $0x464] sm:$0xf]
    %v355 = vld [vmem:[%s1 + $0x468] sm:$0xf]
    %v356 = vld [vmem:[%s1 + $0x46c] sm:$0xf]
    %v357 = vld [vmem:[%s1 + $0x470] sm:$0xf]
    %v358 = vld [vmem:[%s1 + $0x474] sm:$0xf]
    %v359 = vld [vmem:[%s1 + $0x478] sm:$0xf]
    %v360 = vld [vmem:[%s1 + $0x47c] sm:$0xf]
    %v361 = vld [vmem:[%s1 + $0x480] sm:$0xf]
    %v362 = vld [vmem:[%s1 + $0x484] sm:$0xf]
    %v363 = vld [vmem:[%s1 + $0x488] sm:$0xf]
    %v364 = vld [vmem:[%s1 + $0x48c] sm:$0xf]
    %v365 = vld [vmem:[%s1 + $0x490] sm:$0xf]
    %v366 = vld [vmem:[%s1 + $0x494] sm:$0xf]
    %v367 = vld [vmem:[%s1 + $0x498] sm:$0xf]
    %v368 = vld [vmem:[%s1 + $0x49c] sm:$0xf]
    %v369 = vld [vmem:[%s1 + $0x4a0] sm:$0xf]
    %v370 = vld [vmem:[%s1 + $0x4a4] sm:$0xf]
    %v371 = vld [vmem:[%s1 + $0x4a8] sm:$0xf]
    %v372 = vld [vmem:[%s1 + $0x4ac] sm:$0xf]
    %v373 = vld [vmem:[%s1 + $0x4b0] sm:$0xf]
    %v374 = vld [vmem:[%s1 + $0x4b4] sm:$0xf]
    %v375 = vld [vmem:[%s1 + $0x4b8] sm:$0xf]
    %v376 = vld [vmem:[%s1 + $0x4bc] sm:$0xf]
    %v377 = vld [vmem:[%s1 + $0x4c0] sm:$0xf]
    %v378 = vld [vmem:[%s1 + $0x4c4] sm:$0xf]
    %v379 = vld [vmem:[%s1 + $0x4c8] sm:$0xf]
    %v380 = vld [vmem:[%s1 + $0x4cc] sm:$0xf]
    %v381 = vld [vmem:[%s1 + $0x4d0] sm:$0xf]
    %v382 = vld [vmem:[%s1 + $0x4d4] sm:$0xf]
    %v383 = vld [vmem:[%s1 + $0x4d8] sm:$0xf]
    %v384 = vld [vmem:[%s1 + $0x4dc] sm:$0xf]
    %v385 = vld [vmem:[%s1 + $0x4e0] sm:$0xf]
    %v386 = vld [vmem:[%s1 + $0x4e4] sm:$0xf]
    %v387 = vld [vmem:[%s1 + $0x4e8] sm:$0xf]
    %v388 = vld [vmem:[%s1 + $0x4ec] sm:$0xf]
    %v389 = vld [vmem:[%s1 + $0x4f0] sm:$0xf]
    %v390 = vld [vmem:[%s1 + $0x4f4] sm:$0xf]
    %v391 = vld [vmem:[%s1 + $0x4f8] sm:$0xf]
    %v392 = vld [vmem:[%s1 + $0x4fc] sm:$0xf]
    %v393 = vld [vmem:[%s1 + $0x500] sm:$0xf]
    %v394 = vld [vmem:[%s1 + $0x504] sm:$0xf]
    %v395 = vld [vmem:[%s1 + $0x508] sm:$0xf]
    %v396 = vld [vmem:[%s1 + $0x50c] sm:$0xf]
    %v397 = vld [vmem:[%s1 + $0x510] sm:$0xf]
    %v398 = vld [vmem:[%s1 + $0x514] sm:$0xf]
    %v399 = vld [vmem:[%s1 + $0x518] sm:$0xf]
    %v400 = vld [vmem:[%s1 + $0x51c] sm:$0xf]
    %v401 = vld [vmem:[%s1 + $0x520] sm:$0xf]
    %v402 = vld [vmem:[%s1 + $0x524] sm:$0xf]
    %v403 = vld [vmem:[%s1 + $0x528] sm:$0xf]
    %v404 = vld [vmem:[%s1 + $0x52c] sm:$0xf]
    %v405 = vld [vmem:[%s1 + $0x530] sm:$0xf]
    %v406 = vld [vmem:[%s1 + $0x534] sm:$0xf]
    %v407 = vld [vmem:[%s1 + $0x538] sm:$0xf]
    %v408 = vld [vmem:[%s1 + $0x53c] sm:$0xf]
    %v409 = vld [vmem:[%s1 + $0x540] sm:$0xf]
    %v410 = vld [vmem:[%s1 + $0x544] sm:$0xf]
    %v411 = vld [vmem:[%s1 + $0x548] sm:$0xf]
    %v412 = vld [vmem:[%s1 + $0x54c] sm:$0xf]
    %v413 = vld [vmem:[%s1 + $0x550] sm:$0xf]
    %v414 = vld [vmem:[%s1 + $0x554] sm:$0xf]
    %v415 = vld [vmem:[%s1 + $0x558] sm:$0xf]
    %v416 = vld [vmem:[%s1 + $0x55c] sm:$0xf]
    %v417 = vld [vmem:[%s1 + $0x560] sm:$0xf]
    %v418 = vld [vmem:[%s1 + $0x564] sm:$0xf]
    %v419 = vld [vmem:[%s1 + $0x568] sm:$0xf]
    %v420 = vld [vmem:[%s1 + $0x56c] sm:$0xf]
    %v421 = vld [vmem:[%s1 + $0x570] sm:$0xf]
    %v422 = vld [vmem:[%s1 + $0x574] sm:$0xf]
    %v423 = vld [vmem:[%s1 + $0x578] sm:$0xf]
    %v424 = vld [vmem:[%s1 + $0x57c] sm:$0xf]
    %v425 = vld [vmem:[%s1 + $0x580] sm:$0xf]
    %v426 = vld [vmem:[%s1 + $0x584] sm:$0xf]
    %v427 = vld [vmem:[%s1 + $0x588] sm:$0xf]
    %v428 = vld [vmem:[%s1 + $0x58c] sm:$0xf]
    %v429 = vld [vmem:[%s1 + $0x590] sm:$0xf]
    %v430 = vld [vmem:[%s1 + $0x594] sm:$0xf]
    %v431 = vld [vmem:[%s1 + $0x598] sm:$0xf]
    %v432 = vld [vmem:[%s1 + $0x59c] sm:$0xf]
    %v433 = vld [vmem:[%s1 + $0x5a0] sm:$0xf]
    %v434 = vld [vmem:[%s1 + $0x5a4] sm:$0xf]
    %v435 = vld [vmem:[%s1 + $0x5a8] sm:$0xf]
    %v436 = vld [vmem:[%s1 + $0x5ac] sm:$0xf]
    %v437 = vld [vmem:[%s1 + $0x5b0] sm:$0xf]
    %v438 = vld [vmem:[%s1 + $0x5b4] sm:$0xf]
    %v439 = vld [vmem:[%s1 + $0x5b8] sm:$0xf]
    %v440 = vld [vmem:[%s1 + $0x5bc] sm:$0xf]
    %v441 = vld [vmem:[%s1 + $0x5c0] sm:$0xf]
    %v442 = vld [vmem:[%s1 + $0x5c4] sm:$0xf]
    %v443 = vld [vmem:[%s1 + $0x5c8] sm:$0xf]
    %v444 = vld [vmem:[%s1 + $0x5cc] sm:$0xf]
    %v445 = vld [vmem:[%s1 + $0x5d0] sm:$0xf]
    %v446 = vld [vmem:[%s1 + $0x5d4] sm:$0xf]
    %v447 = vld [vmem:[%s1 + $0x5d8] sm:$0xf]
    %v448 = vld [vmem:[%s1 + $0x5dc] sm:$0xf]
    %v449 = vld [vmem:[%s1 + $0x5e0] sm:$0xf]
    %v450 = vld [vmem:[%s1 + $0x5e4] sm:$0xf]
    %v451 = vld [vmem:[%s1 + $0x5e8] sm:$0xf]
    %v452 = vld [vmem:[%s1 + $0x5ec] sm:$0xf]
    %v453 = vld [vmem:[%s1 + $0x5f0] sm:$0xf]
    %v454 = vld [vmem:[%s1 + $0x5f4] sm:$0xf]
    %v455 = vld [vmem:[%s1 + $0x5f8] sm:$0xf]
    %v456 = vld [vmem:[%s1 + $0x5fc] sm:$0xf]
    %v457 = vld [vmem:[%s2] sm:$0x1]
    %v459 = vlaneseq
    %v460 = vshrl.u32 %v459, 7
    %v461 = vsub.s32 0, %v460
    %v462 = vrot.slane %v457, %v461
    %v848 = vunpack.c.l.b16 %v73
    %v849 = vunpack.c.l.b16 %v74
    %v850 = vunpack.c.l.b16 %v75
    %v851 = vunpack.c.l.b16 %v76
    %v852 = vunpack.c.l.b16 %v77
    %v853 = vunpack.c.l.b16 %v78
    %v854 = vunpack.c.l.b16 %v79
    %v855 = vunpack.c.l.b16 %v80
    %v856 = vunpack.c.l.b16 %v81
    %v857 = vunpack.c.l.b16 %v82
    %v858 = vunpack.c.l.b16 %v83
    %v859 = vunpack.c.l.b16 %v84
    %v860 = vunpack.c.l.b16 %v85
    %v861 = vunpack.c.l.b16 %v86
    %v862 = vunpack.c.l.b16 %v87
    %v863 = vunpack.c.l.b16 %v88
    %v864 = vunpack.c.l.b16 %v89
    %v865 = vunpack.c.l.b16 %v90
    %v866 = vunpack.c.l.b16 %v91
    %v867 = vunpack.c.l.b16 %v92
    %v868 = vunpack.c.l.b16 %v93
    %v869 = vunpack.c.l.b16 %v94
    %v870 = vunpack.c.l.b16 %v95
    %v871 = vunpack.c.l.b16 %v96
    %v872 = vunpack.c.l.b16 %v97
    %v873 = vunpack.c.l.b16 %v98
    %v874 = vunpack.c.l.b16 %v99
    %v875 = vunpack.c.l.b16 %v100
    %v876 = vunpack.c.l.b16 %v101
    %v877 = vunpack.c.l.b16 %v102
    %v878 = vunpack.c.l.b16 %v103
    %v879 = vunpack.c.l.b16 %v104
    %v880 = vunpack.c.l.b16 %v105
    %v881 = vunpack.c.l.b16 %v106
    %v882 = vunpack.c.l.b16 %v107
    %v883 = vunpack.c.l.b16 %v108
    %v884 = vunpack.c.l.b16 %v109
    %v885 = vunpack.c.l.b16 %v110
    %v886 = vunpack.c.l.b16 %v111
    %v887 = vunpack.c.l.b16 %v112
    %v888 = vunpack.c.l.b16 %v113
    %v889 = vunpack.c.l.b16 %v114
    %v890 = vunpack.c.l.b16 %v115
    %v891 = vunpack.c.l.b16 %v116
    %v892 = vunpack.c.l.b16 %v117
    %v893 = vunpack.c.l.b16 %v118
    %v894 = vunpack.c.l.b16 %v119
    %v895 = vunpack.c.l.b16 %v120
    %v896 = vunpack.c.l.b16 %v121
    %v897 = vunpack.c.l.b16 %v122
    %v898 = vunpack.c.l.b16 %v123
    %v899 = vunpack.c.l.b16 %v124
    %v900 = vunpack.c.l.b16 %v125
    %v901 = vunpack.c.l.b16 %v126
    %v902 = vunpack.c.l.b16 %v127
    %v903 = vunpack.c.l.b16 %v128
    %v904 = vunpack.c.l.b16 %v129
    %v905 = vunpack.c.l.b16 %v130
    %v906 = vunpack.c.l.b16 %v131
    %v907 = vunpack.c.l.b16 %v132
    %v908 = vunpack.c.l.b16 %v133
    %v909 = vunpack.c.l.b16 %v134
    %v910 = vunpack.c.l.b16 %v135
    %v911 = vunpack.c.l.b16 %v136
    %v912 = vunpack.c.l.b16 %v137
    %v913 = vunpack.c.l.b16 %v138
    %v914 = vunpack.c.l.b16 %v139
    %v915 = vunpack.c.l.b16 %v140
    %v916 = vunpack.c.l.b16 %v141
    %v917 = vunpack.c.l.b16 %v142
    %v918 = vunpack.c.l.b16 %v143
    %v919 = vunpack.c.l.b16 %v144
    %v920 = vunpack.c.l.b16 %v145
    %v921 = vunpack.c.l.b16 %v146
    %v922 = vunpack.c.l.b16 %v147
    %v923 = vunpack.c.l.b16 %v148
    %v924 = vunpack.c.l.b16 %v149
    %v925 = vunpack.c.l.b16 %v150
    %v926 = vunpack.c.l.b16 %v151
    %v927 = vunpack.c.l.b16 %v152
    %v928 = vunpack.c.l.b16 %v153
    %v929 = vunpack.c.l.b16 %v154
    %v930 = vunpack.c.l.b16 %v155
    %v931 = vunpack.c.l.b16 %v156
    %v932 = vunpack.c.l.b16 %v157
    %v933 = vunpack.c.l.b16 %v158
    %v934 = vunpack.c.l.b16 %v159
    %v935 = vunpack.c.l.b16 %v160
    %v936 = vunpack.c.l.b16 %v161
    %v937 = vunpack.c.l.b16 %v162
    %v938 = vunpack.c.l.b16 %v163
    %v939 = vunpack.c.l.b16 %v164
    %v940 = vunpack.c.l.b16 %v165
    %v941 = vunpack.c.l.b16 %v166
    %v942 = vunpack.c.l.b16 %v167
    %v943 = vunpack.c.l.b16 %v168
    %v944 = vunpack.c.l.b16 %v169
    %v945 = vunpack.c.l.b16 %v170
    %v946 = vunpack.c.l.b16 %v171
    %v947 = vunpack.c.l.b16 %v172
    %v948 = vunpack.c.l.b16 %v173
    %v949 = vunpack.c.l.b16 %v174
    %v950 = vunpack.c.l.b16 %v175
    %v951 = vunpack.c.l.b16 %v176
    %v952 = vunpack.c.l.b16 %v177
    %v953 = vunpack.c.l.b16 %v178
    %v954 = vunpack.c.l.b16 %v179
    %v955 = vunpack.c.l.b16 %v180
    %v956 = vunpack.c.l.b16 %v181
    %v957 = vunpack.c.l.b16 %v182
    %v958 = vunpack.c.l.b16 %v183
    %v959 = vunpack.c.l.b16 %v184
    %v960 = vunpack.c.l.b16 %v185
    %v961 = vunpack.c.l.b16 %v186
    %v962 = vunpack.c.l.b16 %v187
    %v963 = vunpack.c.l.b16 %v188
    %v964 = vunpack.c.l.b16 %v189
    %v965 = vunpack.c.l.b16 %v190
    %v966 = vunpack.c.l.b16 %v191
    %v967 = vunpack.c.l.b16 %v192
    %v968 = vunpack.c.l.b16 %v193
    %v969 = vunpack.c.l.b16 %v194
    %v970 = vunpack.c.l.b16 %v195
    %v971 = vunpack.c.l.b16 %v196
    %v972 = vunpack.c.l.b16 %v197
    %v973 = vunpack.c.l.b16 %v198
    %v974 = vunpack.c.l.b16 %v199
    %v975 = vunpack.c.l.b16 %v200
    %v976 = vunpack.c.l.b16 %v201
    %v977 = vunpack.c.l.b16 %v202
    %v978 = vunpack.c.l.b16 %v203
    %v979 = vunpack.c.l.b16 %v204
    %v980 = vunpack.c.l.b16 %v205
    %v981 = vunpack.c.l.b16 %v206
    %v982 = vunpack.c.l.b16 %v207
    %v983 = vunpack.c.l.b16 %v208
    %v984 = vunpack.c.l.b16 %v209
    %v985 = vunpack.c.l.b16 %v210
    %v986 = vunpack.c.l.b16 %v211
    %v987 = vunpack.c.l.b16 %v212
    %v988 = vunpack.c.l.b16 %v213
    %v989 = vunpack.c.l.b16 %v214
    %v990 = vunpack.c.l.b16 %v215
    %v991 = vunpack.c.l.b16 %v216
    %v992 = vunpack.c.l.b16 %v217
    %v993 = vunpack.c.l.b16 %v218
    %v994 = vunpack.c.l.b16 %v219
    %v995 = vunpack.c.l.b16 %v220
    %v996 = vunpack.c.l.b16 %v221
    %v997 = vunpack.c.l.b16 %v222
    %v998 = vunpack.c.l.b16 %v223
    %v999 = vunpack.c.l.b16 %v224
    %v1000 = vunpack.c.l.b16 %v225
    %v1001 = vunpack.c.l.b16 %v226
    %v1002 = vunpack.c.l.b16 %v227
    %v1003 = vunpack.c.l.b16 %v228
    %v1004 = vunpack.c.l.b16 %v229
    %v1005 = vunpack.c.l.b16 %v230
    %v1006 = vunpack.c.l.b16 %v231
    %v1007 = vunpack.c.l.b16 %v232
    %v1008 = vunpack.c.l.b16 %v233
    %v1009 = vunpack.c.l.b16 %v234
    %v1010 = vunpack.c.l.b16 %v235
    %v1011 = vunpack.c.l.b16 %v236
    %v1012 = vunpack.c.l.b16 %v237
    %v1013 = vunpack.c.l.b16 %v238
    %v1014 = vunpack.c.l.b16 %v239
    %v1015 = vunpack.c.l.b16 %v240
    %v1016 = vunpack.c.l.b16 %v241
    %v1017 = vunpack.c.l.b16 %v242
    %v1018 = vunpack.c.l.b16 %v243
    %v1019 = vunpack.c.l.b16 %v244
    %v1020 = vunpack.c.l.b16 %v245
    %v1021 = vunpack.c.l.b16 %v246
    %v1022 = vunpack.c.l.b16 %v247
    %v1023 = vunpack.c.l.b16 %v248
    %v1024 = vunpack.c.l.b16 %v249
    %v1025 = vunpack.c.l.b16 %v250
    %v1026 = vunpack.c.l.b16 %v251
    %v1027 = vunpack.c.l.b16 %v252
    %v1028 = vunpack.c.l.b16 %v253
    %v1029 = vunpack.c.l.b16 %v254
    %v1030 = vunpack.c.l.b16 %v255
    %v1031 = vunpack.c.l.b16 %v256
    %v1032 = vunpack.c.l.b16 %v257
    %v1033 = vunpack.c.l.b16 %v258
    %v1034 = vunpack.c.l.b16 %v259
    %v1035 = vunpack.c.l.b16 %v260
    %v1036 = vunpack.c.l.b16 %v261
    %v1037 = vunpack.c.l.b16 %v262
    %v1038 = vunpack.c.l.b16 %v263
    %v1039 = vunpack.c.l.b16 %v264
    %v1040 = vunpack.c.l.b16 %v265
    %v1041 = vunpack.c.l.b16 %v266
    %v1042 = vunpack.c.l.b16 %v267
    %v1043 = vunpack.c.l.b16 %v268
    %v1044 = vunpack.c.l.b16 %v269
    %v1045 = vunpack.c.l.b16 %v270
    %v1046 = vunpack.c.l.b16 %v271
    %v1047 = vunpack.c.l.b16 %v272
    %v1048 = vunpack.c.l.b16 %v273
    %v1049 = vunpack.c.l.b16 %v274
    %v1050 = vunpack.c.l.b16 %v275
    %v1051 = vunpack.c.l.b16 %v276
    %v1052 = vunpack.c.l.b16 %v277
    %v1053 = vunpack.c.l.b16 %v278
    %v1054 = vunpack.c.l.b16 %v279
    %v1055 = vunpack.c.l.b16 %v280
    %v1056 = vunpack.c.l.b16 %v281
    %v1057 = vunpack.c.l.b16 %v282
    %v1058 = vunpack.c.l.b16 %v283
    %v1059 = vunpack.c.l.b16 %v284
    %v1060 = vunpack.c.l.b16 %v285
    %v1061 = vunpack.c.l.b16 %v286
    %v1062 = vunpack.c.l.b16 %v287
    %v1063 = vunpack.c.l.b16 %v288
    %v1064 = vunpack.c.l.b16 %v289
    %v1065 = vunpack.c.l.b16 %v290
    %v1066 = vunpack.c.l.b16 %v291
    %v1067 = vunpack.c.l.b16 %v292
    %v1068 = vunpack.c.l.b16 %v293
    %v1069 = vunpack.c.l.b16 %v294
    %v1070 = vunpack.c.l.b16 %v295
    %v1071 = vunpack.c.l.b16 %v296
    %v1072 = vunpack.c.l.b16 %v297
    %v1073 = vunpack.c.l.b16 %v298
    %v1074 = vunpack.c.l.b16 %v299
    %v1075 = vunpack.c.l.b16 %v300
    %v1076 = vunpack.c.l.b16 %v301
    %v1077 = vunpack.c.l.b16 %v302
    %v1078 = vunpack.c.l.b16 %v303
    %v1079 = vunpack.c.l.b16 %v304
    %v1080 = vunpack.c.l.b16 %v305
    %v1081 = vunpack.c.l.b16 %v306
    %v1082 = vunpack.c.l.b16 %v307
    %v1083 = vunpack.c.l.b16 %v308
    %v1084 = vunpack.c.l.b16 %v309
    %v1085 = vunpack.c.l.b16 %v310
    %v1086 = vunpack.c.l.b16 %v311
    %v1087 = vunpack.c.l.b16 %v312
    %v1088 = vunpack.c.l.b16 %v313
    %v1089 = vunpack.c.l.b16 %v314
    %v1090 = vunpack.c.l.b16 %v315
    %v1091 = vunpack.c.l.b16 %v316
    %v1092 = vunpack.c.l.b16 %v317
    %v1093 = vunpack.c.l.b16 %v318
    %v1094 = vunpack.c.l.b16 %v319
    %v1095 = vunpack.c.l.b16 %v320
    %v1096 = vunpack.c.l.b16 %v321
    %v1097 = vunpack.c.l.b16 %v322
    %v1098 = vunpack.c.l.b16 %v323
    %v1099 = vunpack.c.l.b16 %v324
    %v1100 = vunpack.c.l.b16 %v325
    %v1101 = vunpack.c.l.b16 %v326
    %v1102 = vunpack.c.l.b16 %v327
    %v1103 = vunpack.c.l.b16 %v328
    %v1104 = vunpack.c.l.b16 %v329
    %v1105 = vunpack.c.l.b16 %v330
    %v1106 = vunpack.c.l.b16 %v331
    %v1107 = vunpack.c.l.b16 %v332
    %v1108 = vunpack.c.l.b16 %v333
    %v1109 = vunpack.c.l.b16 %v334
    %v1110 = vunpack.c.l.b16 %v335
    %v1111 = vunpack.c.l.b16 %v336
    %v1112 = vunpack.c.l.b16 %v337
    %v1113 = vunpack.c.l.b16 %v338
    %v1114 = vunpack.c.l.b16 %v339
    %v1115 = vunpack.c.l.b16 %v340
    %v1116 = vunpack.c.l.b16 %v341
    %v1117 = vunpack.c.l.b16 %v342
    %v1118 = vunpack.c.l.b16 %v343
    %v1119 = vunpack.c.l.b16 %v344
    %v1120 = vunpack.c.l.b16 %v345
    %v1121 = vunpack.c.l.b16 %v346
    %v1122 = vunpack.c.l.b16 %v347
    %v1123 = vunpack.c.l.b16 %v348
    %v1124 = vunpack.c.l.b16 %v349
    %v1125 = vunpack.c.l.b16 %v350
    %v1126 = vunpack.c.l.b16 %v351
    %v1127 = vunpack.c.l.b16 %v352
    %v1128 = vunpack.c.l.b16 %v353
    %v1129 = vunpack.c.l.b16 %v354
    %v1130 = vunpack.c.l.b16 %v355
    %v1131 = vunpack.c.l.b16 %v356
    %v1132 = vunpack.c.l.b16 %v357
    %v1133 = vunpack.c.l.b16 %v358
    %v1134 = vunpack.c.l.b16 %v359
    %v1135 = vunpack.c.l.b16 %v360
    %v1136 = vunpack.c.l.b16 %v361
    %v1137 = vunpack.c.l.b16 %v362
    %v1138 = vunpack.c.l.b16 %v363
    %v1139 = vunpack.c.l.b16 %v364
    %v1140 = vunpack.c.l.b16 %v365
    %v1141 = vunpack.c.l.b16 %v366
    %v1142 = vunpack.c.l.b16 %v367
    %v1143 = vunpack.c.l.b16 %v368
    %v1144 = vunpack.c.l.b16 %v369
    %v1145 = vunpack.c.l.b16 %v370
    %v1146 = vunpack.c.l.b16 %v371
    %v1147 = vunpack.c.l.b16 %v372
    %v1148 = vunpack.c.l.b16 %v373
    %v1149 = vunpack.c.l.b16 %v374
    %v1150 = vunpack.c.l.b16 %v375
    %v1151 = vunpack.c.l.b16 %v376
    %v1152 = vunpack.c.l.b16 %v377
    %v1153 = vunpack.c.l.b16 %v378
    %v1154 = vunpack.c.l.b16 %v379
    %v1155 = vunpack.c.l.b16 %v380
    %v1156 = vunpack.c.l.b16 %v381
    %v1157 = vunpack.c.l.b16 %v382
    %v1158 = vunpack.c.l.b16 %v383
    %v1159 = vunpack.c.l.b16 %v384
    %v1160 = vunpack.c.l.b16 %v385
    %v1161 = vunpack.c.l.b16 %v386
    %v1162 = vunpack.c.l.b16 %v387
    %v1163 = vunpack.c.l.b16 %v388
    %v1164 = vunpack.c.l.b16 %v389
    %v1165 = vunpack.c.l.b16 %v390
    %v1166 = vunpack.c.l.b16 %v391
    %v1167 = vunpack.c.l.b16 %v392
    %v1168 = vunpack.c.l.b16 %v393
    %v1169 = vunpack.c.l.b16 %v394
    %v1170 = vunpack.c.l.b16 %v395
    %v1171 = vunpack.c.l.b16 %v396
    %v1172 = vunpack.c.l.b16 %v397
    %v1173 = vunpack.c.l.b16 %v398
    %v1174 = vunpack.c.l.b16 %v399
    %v1175 = vunpack.c.l.b16 %v400
    %v1176 = vunpack.c.l.b16 %v401
    %v1177 = vunpack.c.l.b16 %v402
    %v1178 = vunpack.c.l.b16 %v403
    %v1179 = vunpack.c.l.b16 %v404
    %v1180 = vunpack.c.l.b16 %v405
    %v1181 = vunpack.c.l.b16 %v406
    %v1182 = vunpack.c.l.b16 %v407
    %v1183 = vunpack.c.l.b16 %v408
    %v1184 = vunpack.c.l.b16 %v409
    %v1185 = vunpack.c.l.b16 %v410
    %v1186 = vunpack.c.l.b16 %v411
    %v1187 = vunpack.c.l.b16 %v412
    %v1188 = vunpack.c.l.b16 %v413
    %v1189 = vunpack.c.l.b16 %v414
    %v1190 = vunpack.c.l.b16 %v415
    %v1191 = vunpack.c.l.b16 %v416
    %v1192 = vunpack.c.l.b16 %v417
    %v1193 = vunpack.c.l.b16 %v418
    %v1194 = vunpack.c.l.b16 %v419
    %v1195 = vunpack.c.l.b16 %v420
    %v1196 = vunpack.c.l.b16 %v421
    %v1197 = vunpack.c.l.b16 %v422
    %v1198 = vunpack.c.l.b16 %v423
    %v1199 = vunpack.c.l.b16 %v424
    %v1200 = vunpack.c.l.b16 %v425
    %v1201 = vunpack.c.l.b16 %v426
    %v1202 = vunpack.c.l.b16 %v427
    %v1203 = vunpack.c.l.b16 %v428
    %v1204 = vunpack.c.l.b16 %v429
    %v1205 = vunpack.c.l.b16 %v430
    %v1206 = vunpack.c.l.b16 %v431
    %v1207 = vunpack.c.l.b16 %v432
    %v1208 = vunpack.c.l.b16 %v433
    %v1209 = vunpack.c.l.b16 %v434
    %v1210 = vunpack.c.l.b16 %v435
    %v1211 = vunpack.c.l.b16 %v436
    %v1212 = vunpack.c.l.b16 %v437
    %v1213 = vunpack.c.l.b16 %v438
    %v1214 = vunpack.c.l.b16 %v439
    %v1215 = vunpack.c.l.b16 %v440
    %v1216 = vunpack.c.l.b16 %v441
    %v1217 = vunpack.c.l.b16 %v442
    %v1218 = vunpack.c.l.b16 %v443
    %v1219 = vunpack.c.l.b16 %v444
    %v1220 = vunpack.c.l.b16 %v445
    %v1221 = vunpack.c.l.b16 %v446
    %v1222 = vunpack.c.l.b16 %v447
    %v1223 = vunpack.c.l.b16 %v448
    %v1224 = vunpack.c.l.b16 %v449
    %v1225 = vunpack.c.l.b16 %v450
    %v1226 = vunpack.c.l.b16 %v451
    %v1227 = vunpack.c.l.b16 %v452
    %v1228 = vunpack.c.l.b16 %v453
    %v1229 = vunpack.c.l.b16 %v454
    %v1230 = vunpack.c.l.b16 %v455
    %v1231 = vunpack.c.l.b16 %v456
    %v1232 = vpack.c.b16 %v849, %v848
    %v1233 = vpack.c.b16 %v851, %v850
    %v1234 = vpack.c.b16 %v853, %v852
    %v1235 = vpack.c.b16 %v855, %v854
    %v1236 = vpack.c.b16 %v857, %v856
    %v1237 = vpack.c.b16 %v859, %v858
    %v1238 = vpack.c.b16 %v861, %v860
    %v1239 = vpack.c.b16 %v863, %v862
    %v1240 = vpack.c.b16 %v865, %v864
    %v1241 = vpack.c.b16 %v867, %v866
    %v1242 = vpack.c.b16 %v869, %v868
    %v1243 = vpack.c.b16 %v871, %v870
    %v1244 = vpack.c.b16 %v873, %v872
    %v1245 = vpack.c.b16 %v875, %v874
    %v1246 = vpack.c.b16 %v877, %v876
    %v1247 = vpack.c.b16 %v879, %v878
    %v1248 = vpack.c.b16 %v881, %v880
    %v1249 = vpack.c.b16 %v883, %v882
    %v1250 = vpack.c.b16 %v885, %v884
    %v1251 = vpack.c.b16 %v887, %v886
    %v1252 = vpack.c.b16 %v889, %v888
    %v1253 = vpack.c.b16 %v891, %v890
    %v1254 = vpack.c.b16 %v893, %v892
    %v1255 = vpack.c.b16 %v895, %v894
    %v1256 = vpack.c.b16 %v897, %v896
    %v1257 = vpack.c.b16 %v899, %v898
    %v1258 = vpack.c.b16 %v901, %v900
    %v1259 = vpack.c.b16 %v903, %v902
    %v1260 = vpack.c.b16 %v905, %v904
    %v1261 = vpack.c.b16 %v907, %v906
    %v1262 = vpack.c.b16 %v909, %v908
    %v1263 = vpack.c.b16 %v911, %v910
    %v1264 = vpack.c.b16 %v913, %v912
    %v1265 = vpack.c.b16 %v915, %v914
    %v1266 = vpack.c.b16 %v917, %v916
    %v1267 = vpack.c.b16 %v919, %v918
    %v1268 = vpack.c.b16 %v921, %v920
    %v1269 = vpack.c.b16 %v923, %v922
    %v1270 = vpack.c.b16 %v925, %v924
    %v1271 = vpack.c.b16 %v927, %v926
    %v1272 = vpack.c.b16 %v929, %v928
    %v1273 = vpack.c.b16 %v931, %v930
    %v1274 = vpack.c.b16 %v933, %v932
    %v1275 = vpack.c.b16 %v935, %v934
    %v1276 = vpack.c.b16 %v937, %v936
    %v1277 = vpack.c.b16 %v939, %v938
    %v1278 = vpack.c.b16 %v941, %v940
    %v1279 = vpack.c.b16 %v943, %v942
    %v1280 = vpack.c.b16 %v945, %v944
    %v1281 = vpack.c.b16 %v947, %v946
    %v1282 = vpack.c.b16 %v949, %v948
    %v1283 = vpack.c.b16 %v951, %v950
    %v1284 = vpack.c.b16 %v953, %v952
    %v1285 = vpack.c.b16 %v955, %v954
    %v1286 = vpack.c.b16 %v957, %v956
    %v1287 = vpack.c.b16 %v959, %v958
    %v1288 = vpack.c.b16 %v961, %v960
    %v1289 = vpack.c.b16 %v963, %v962
    %v1290 = vpack.c.b16 %v965, %v964
    %v1291 = vpack.c.b16 %v967, %v966
    %v1292 = vpack.c.b16 %v969, %v968
    %v1293 = vpack.c.b16 %v971, %v970
    %v1294 = vpack.c.b16 %v973, %v972
    %v1295 = vpack.c.b16 %v975, %v974
    %v1296 = vpack.c.b16 %v977, %v976
    %v1297 = vpack.c.b16 %v979, %v978
    %v1298 = vpack.c.b16 %v981, %v980
    %v1299 = vpack.c.b16 %v983, %v982
    %v1300 = vpack.c.b16 %v985, %v984
    %v1301 = vpack.c.b16 %v987, %v986
    %v1302 = vpack.c.b16 %v989, %v988
    %v1303 = vpack.c.b16 %v991, %v990
    %v1304 = vpack.c.b16 %v993, %v992
    %v1305 = vpack.c.b16 %v995, %v994
    %v1306 = vpack.c.b16 %v997, %v996
    %v1307 = vpack.c.b16 %v999, %v998
    %v1308 = vpack.c.b16 %v1001, %v1000
    %v1309 = vpack.c.b16 %v1003, %v1002
    %v1310 = vpack.c.b16 %v1005, %v1004
    %v1311 = vpack.c.b16 %v1007, %v1006
    %v1312 = vpack.c.b16 %v1009, %v1008
    %v1313 = vpack.c.b16 %v1011, %v1010
    %v1314 = vpack.c.b16 %v1013, %v1012
    %v1315 = vpack.c.b16 %v1015, %v1014
    %v1316 = vpack.c.b16 %v1017, %v1016
    %v1317 = vpack.c.b16 %v1019, %v1018
    %v1318 = vpack.c.b16 %v1021, %v1020
    %v1319 = vpack.c.b16 %v1023, %v1022
    %v1320 = vpack.c.b16 %v1025, %v1024
    %v1321 = vpack.c.b16 %v1027, %v1026
    %v1322 = vpack.c.b16 %v1029, %v1028
    %v1323 = vpack.c.b16 %v1031, %v1030
    %v1324 = vpack.c.b16 %v1033, %v1032
    %v1325 = vpack.c.b16 %v1035, %v1034
    %v1326 = vpack.c.b16 %v1037, %v1036
    %v1327 = vpack.c.b16 %v1039, %v1038
    %v1328 = vpack.c.b16 %v1041, %v1040
    %v1329 = vpack.c.b16 %v1043, %v1042
    %v1330 = vpack.c.b16 %v1045, %v1044
    %v1331 = vpack.c.b16 %v1047, %v1046
    %v1332 = vpack.c.b16 %v1049, %v1048
    %v1333 = vpack.c.b16 %v1051, %v1050
    %v1334 = vpack.c.b16 %v1053, %v1052
    %v1335 = vpack.c.b16 %v1055, %v1054
    %v1336 = vpack.c.b16 %v1057, %v1056
    %v1337 = vpack.c.b16 %v1059, %v1058
    %v1338 = vpack.c.b16 %v1061, %v1060
    %v1339 = vpack.c.b16 %v1063, %v1062
    %v1340 = vpack.c.b16 %v1065, %v1064
    %v1341 = vpack.c.b16 %v1067, %v1066
    %v1342 = vpack.c.b16 %v1069, %v1068
    %v1343 = vpack.c.b16 %v1071, %v1070
    %v1344 = vpack.c.b16 %v1073, %v1072
    %v1345 = vpack.c.b16 %v1075, %v1074
    %v1346 = vpack.c.b16 %v1077, %v1076
    %v1347 = vpack.c.b16 %v1079, %v1078
    %v1348 = vpack.c.b16 %v1081, %v1080
    %v1349 = vpack.c.b16 %v1083, %v1082
    %v1350 = vpack.c.b16 %v1085, %v1084
    %v1351 = vpack.c.b16 %v1087, %v1086
    %v1352 = vpack.c.b16 %v1089, %v1088
    %v1353 = vpack.c.b16 %v1091, %v1090
    %v1354 = vpack.c.b16 %v1093, %v1092
    %v1355 = vpack.c.b16 %v1095, %v1094
    %v1356 = vpack.c.b16 %v1097, %v1096
    %v1357 = vpack.c.b16 %v1099, %v1098
    %v1358 = vpack.c.b16 %v1101, %v1100
    %v1359 = vpack.c.b16 %v1103, %v1102
    %v1360 = vpack.c.b16 %v1105, %v1104
    %v1361 = vpack.c.b16 %v1107, %v1106
    %v1362 = vpack.c.b16 %v1109, %v1108
    %v1363 = vpack.c.b16 %v1111, %v1110
    %v1364 = vpack.c.b16 %v1113, %v1112
    %v1365 = vpack.c.b16 %v1115, %v1114
    %v1366 = vpack.c.b16 %v1117, %v1116
    %v1367 = vpack.c.b16 %v1119, %v1118
    %v1368 = vpack.c.b16 %v1121, %v1120
    %v1369 = vpack.c.b16 %v1123, %v1122
    %v1370 = vpack.c.b16 %v1125, %v1124
    %v1371 = vpack.c.b16 %v1127, %v1126
    %v1372 = vpack.c.b16 %v1129, %v1128
    %v1373 = vpack.c.b16 %v1131, %v1130
    %v1374 = vpack.c.b16 %v1133, %v1132
    %v1375 = vpack.c.b16 %v1135, %v1134
    %v1376 = vpack.c.b16 %v1137, %v1136
    %v1377 = vpack.c.b16 %v1139, %v1138
    %v1378 = vpack.c.b16 %v1141, %v1140
    %v1379 = vpack.c.b16 %v1143, %v1142
    %v1380 = vpack.c.b16 %v1145, %v1144
    %v1381 = vpack.c.b16 %v1147, %v1146
    %v1382 = vpack.c.b16 %v1149, %v1148
    %v1383 = vpack.c.b16 %v1151, %v1150
    %v1384 = vpack.c.b16 %v1153, %v1152
    %v1385 = vpack.c.b16 %v1155, %v1154
    %v1386 = vpack.c.b16 %v1157, %v1156
    %v1387 = vpack.c.b16 %v1159, %v1158
    %v1388 = vpack.c.b16 %v1161, %v1160
    %v1389 = vpack.c.b16 %v1163, %v1162
    %v1390 = vpack.c.b16 %v1165, %v1164
    %v1391 = vpack.c.b16 %v1167, %v1166
    %v1392 = vpack.c.b16 %v1169, %v1168
    %v1393 = vpack.c.b16 %v1171, %v1170
    %v1394 = vpack.c.b16 %v1173, %v1172
    %v1395 = vpack.c.b16 %v1175, %v1174
    %v1396 = vpack.c.b16 %v1177, %v1176
    %v1397 = vpack.c.b16 %v1179, %v1178
    %v1398 = vpack.c.b16 %v1181, %v1180
    %v1399 = vpack.c.b16 %v1183, %v1182
    %v1400 = vpack.c.b16 %v1185, %v1184
    %v1401 = vpack.c.b16 %v1187, %v1186
    %v1402 = vpack.c.b16 %v1189, %v1188
    %v1403 = vpack.c.b16 %v1191, %v1190
    %v1404 = vpack.c.b16 %v1193, %v1192
    %v1405 = vpack.c.b16 %v1195, %v1194
    %v1406 = vpack.c.b16 %v1197, %v1196
    %v1407 = vpack.c.b16 %v1199, %v1198
    %v1408 = vpack.c.b16 %v1201, %v1200
    %v1409 = vpack.c.b16 %v1203, %v1202
    %v1410 = vpack.c.b16 %v1205, %v1204
    %v1411 = vpack.c.b16 %v1207, %v1206
    %v1412 = vpack.c.b16 %v1209, %v1208
    %v1413 = vpack.c.b16 %v1211, %v1210
    %v1414 = vpack.c.b16 %v1213, %v1212
    %v1415 = vpack.c.b16 %v1215, %v1214
    %v1416 = vpack.c.b16 %v1217, %v1216
    %v1417 = vpack.c.b16 %v1219, %v1218
    %v1418 = vpack.c.b16 %v1221, %v1220
    %v1419 = vpack.c.b16 %v1223, %v1222
    %v1420 = vpack.c.b16 %v1225, %v1224
    %v1421 = vpack.c.b16 %v1227, %v1226
    %v1422 = vpack.c.b16 %v1229, %v1228
    %v1423 = vpack.c.b16 %v1231, %v1230
    %1616 = vmatprep.subr.bf16.mxu0 0
    %1617 = vmatpush1.bf16.msra.mxu0 %v1232
    %1618 = vmatprep.subr.bf16.mxu0 0
    %1619 = vmatpush1.bf16.msra.mxu0 %v1233
    %1620 = vmatprep.subr.bf16.mxu0 0
    %1621 = vmatpush1.bf16.msra.mxu0 %v1234
    %1622 = vmatprep.subr.bf16.mxu0 0
    %1623 = vmatpush1.bf16.msra.mxu0 %v1235
    %1624 = vmatprep.subr.bf16.mxu0 0
    %1625 = vmatpush1.bf16.msra.mxu0 %v1236
    %1626 = vmatprep.subr.bf16.mxu0 0
    %1627 = vmatpush1.bf16.msra.mxu0 %v1237
    %1628 = vmatprep.subr.bf16.mxu0 0
    %1629 = vmatpush1.bf16.msra.mxu0 %v1238
    %1630 = vmatprep.subr.bf16.mxu0 0
    %1631 = vmatpush1.bf16.msra.mxu0 %v1239
    %1632 = vmatprep.subr.bf16.mxu0 0
    %1633 = vmatpush1.bf16.msra.mxu0 %v1240
    %1634 = vmatprep.subr.bf16.mxu0 0
    %1635 = vmatpush1.bf16.msra.mxu0 %v1241
    %1636 = vmatprep.subr.bf16.mxu0 0
    %1637 = vmatpush1.bf16.msra.mxu0 %v1242
    %1638 = vmatprep.subr.bf16.mxu0 0
    %1639 = vmatpush1.bf16.msra.mxu0 %v1243
    %1640 = vmatprep.subr.bf16.mxu0 0
    %1641 = vmatpush1.bf16.msra.mxu0 %v1244
    %1642 = vmatprep.subr.bf16.mxu0 0
    %1643 = vmatpush1.bf16.msra.mxu0 %v1245
    %1644 = vmatprep.subr.bf16.mxu0 0
    %1645 = vmatpush1.bf16.msra.mxu0 %v1246
    %1646 = vmatprep.subr.bf16.mxu0 0
    %1647 = vmatpush1.bf16.msra.mxu0 %v1247
    %1648 = vmatprep.mubr.bf16.mxu0 %v50
    %1649 = vmatmul.mubr.bf16.gmra.mrb[0].mxu0 %v49
    %v1650 = vpop.f32.mrb[0].mxu0
    %v1651 = vadd.f32 %v462, %v1650
    %v1652 = vpop.f32.mrb[0].mxu0
    %v1653 = vpop.f32.mrb[0].mxu0
    %v1654 = vpop.f32.mrb[0].mxu0
    %1655 = vdwg.mxu0
    %1656 = vmatprep.subr.bf16.mxu0 0
    %1657 = vmatpush1.bf16.msra.mxu0 %v1248
    %1658 = vmatprep.subr.bf16.mxu0 0
    %1659 = vmatpush1.bf16.msra.mxu0 %v1249
    %1660 = vmatprep.subr.bf16.mxu0 0
    %1661 = vmatpush1.bf16.msra.mxu0 %v1250
    %1662 = vmatprep.subr.bf16.mxu0 0
    %1663 = vmatpush1.bf16.msra.mxu0 %v1251
    %1664 = vmatprep.subr.bf16.mxu0 0
    %1665 = vmatpush1.bf16.msra.mxu0 %v1252
    %1666 = vmatprep.subr.bf16.mxu0 0
    %1667 = vmatpush1.bf16.msra.mxu0 %v1253
    %1668 = vmatprep.subr.bf16.mxu0 0
    %1669 = vmatpush1.bf16.msra.mxu0 %v1254
    %1670 = vmatprep.subr.bf16.mxu0 0
    %1671 = vmatpush1.bf16.msra.mxu0 %v1255
    %1672 = vmatprep.subr.bf16.mxu0 0
    %1673 = vmatpush1.bf16.msra.mxu0 %v1256
    %1674 = vmatprep.subr.bf16.mxu0 0
    %1675 = vmatpush1.bf16.msra.mxu0 %v1257
    %1676 = vmatprep.subr.bf16.mxu0 0
    %1677 = vmatpush1.bf16.msra.mxu0 %v1258
    %1678 = vmatprep.subr.bf16.mxu0 0
    %1679 = vmatpush1.bf16.msra.mxu0 %v1259
    %1680 = vmatprep.subr.bf16.mxu0 0
    %1681 = vmatpush1.bf16.msra.mxu0 %v1260
    %1682 = vmatprep.subr.bf16.mxu0 0
    %1683 = vmatpush1.bf16.msra.mxu0 %v1261
    %1684 = vmatprep.subr.bf16.mxu0 0
    %1685 = vmatpush1.bf16.msra.mxu0 %v1262
    %1686 = vmatprep.subr.bf16.mxu0 0
    %1687 = vmatpush1.bf16.msra.mxu0 %v1263
    %1688 = vmatprep.mubr.bf16.mxu0 %v52
    %1689 = vmatmul.mubr.bf16.gmra.mrb[0].mxu0 %v51
    %v1690 = vpop.f32.mrb[0].mxu0
    %v1691 = vadd.f32 %v1651, %v1690
    %v1692 = vpop.f32.mrb[0].mxu0
    %v1693 = vpop.f32.mrb[0].mxu0
    %v1694 = vpop.f32.mrb[0].mxu0
    %1695 = vdwg.mxu0
    %1696 = vmatprep.subr.bf16.mxu0 0
    %1697 = vmatpush1.bf16.msra.mxu0 %v1264
    %1698 = vmatprep.subr.bf16.mxu0 0
    %1699 = vmatpush1.bf16.msra.mxu0 %v1265
    %1700 = vmatprep.subr.bf16.mxu0 0
    %1701 = vmatpush1.bf16.msra.mxu0 %v1266
    %1702 = vmatprep.subr.bf16.mxu0 0
    %1703 = vmatpush1.bf16.msra.mxu0 %v1267
    %1704 = vmatprep.subr.bf16.mxu0 0
    %1705 = vmatpush1.bf16.msra.mxu0 %v1268
    %1706 = vmatprep.subr.bf16.mxu0 0
    %1707 = vmatpush1.bf16.msra.mxu0 %v1269
    %1708 = vmatprep.subr.bf16.mxu0 0
    %1709 = vmatpush1.bf16.msra.mxu0 %v1270
    %1710 = vmatprep.subr.bf16.mxu0 0
    %1711 = vmatpush1.bf16.msra.mxu0 %v1271
    %1712 = vmatprep.subr.bf16.mxu0 0
    %1713 = vmatpush1.bf16.msra.mxu0 %v1272
    %1714 = vmatprep.subr.bf16.mxu0 0
    %1715 = vmatpush1.bf16.msra.mxu0 %v1273
    %1716 = vmatprep.subr.bf16.mxu0 0
    %1717 = vmatpush1.bf16.msra.mxu0 %v1274
    %1718 = vmatprep.subr.bf16.mxu0 0
    %1719 = vmatpush1.bf16.msra.mxu0 %v1275
    %1720 = vmatprep.subr.bf16.mxu0 0
    %1721 = vmatpush1.bf16.msra.mxu0 %v1276
    %1722 = vmatprep.subr.bf16.mxu0 0
    %1723 = vmatpush1.bf16.msra.mxu0 %v1277
    %1724 = vmatprep.subr.bf16.mxu0 0
    %1725 = vmatpush1.bf16.msra.mxu0 %v1278
    %1726 = vmatprep.subr.bf16.mxu0 0
    %1727 = vmatpush1.bf16.msra.mxu0 %v1279
    %1728 = vmatprep.mubr.bf16.mxu0 %v54
    %1729 = vmatmul.mubr.bf16.gmra.mrb[0].mxu0 %v53
    %v1730 = vpop.f32.mrb[0].mxu0
    %v1731 = vadd.f32 %v1691, %v1730
    %v1732 = vpop.f32.mrb[0].mxu0
    %v1733 = vpop.f32.mrb[0].mxu0
    %v1734 = vpop.f32.mrb[0].mxu0
    %1735 = vdwg.mxu0
    %1736 = vmatprep.subr.bf16.mxu0 0
    %1737 = vmatpush1.bf16.msra.mxu0 %v1280
    %1738 = vmatprep.subr.bf16.mxu0 0
    %1739 = vmatpush1.bf16.msra.mxu0 %v1281
    %1740 = vmatprep.subr.bf16.mxu0 0
    %1741 = vmatpush1.bf16.msra.mxu0 %v1282
    %1742 = vmatprep.subr.bf16.mxu0 0
    %1743 = vmatpush1.bf16.msra.mxu0 %v1283
    %1744 = vmatprep.subr.bf16.mxu0 0
    %1745 = vmatpush1.bf16.msra.mxu0 %v1284
    %1746 = vmatprep.subr.bf16.mxu0 0
    %1747 = vmatpush1.bf16.msra.mxu0 %v1285
    %1748 = vmatprep.subr.bf16.mxu0 0
    %1749 = vmatpush1.bf16.msra.mxu0 %v1286
    %1750 = vmatprep.subr.bf16.mxu0 0
    %1751 = vmatpush1.bf16.msra.mxu0 %v1287
    %1752 = vmatprep.subr.bf16.mxu0 0
    %1753 = vmatpush1.bf16.msra.mxu0 %v1288
    %1754 = vmatprep.subr.bf16.mxu0 0
    %1755 = vmatpush1.bf16.msra.mxu0 %v1289
    %1756 = vmatprep.subr.bf16.mxu0 0
    %1757 = vmatpush1.bf16.msra.mxu0 %v1290
    %1758 = vmatprep.subr.bf16.mxu0 0
    %1759 = vmatpush1.bf16.msra.mxu0 %v1291
    %1760 = vmatprep.subr.bf16.mxu0 0
    %1761 = vmatpush1.bf16.msra.mxu0 %v1292
    %1762 = vmatprep.subr.bf16.mxu0 0
    %1763 = vmatpush1.bf16.msra.mxu0 %v1293
    %1764 = vmatprep.subr.bf16.mxu0 0
    %1765 = vmatpush1.bf16.msra.mxu0 %v1294
    %1766 = vmatprep.subr.bf16.mxu0 0
    %1767 = vmatpush1.bf16.msra.mxu0 %v1295
    %1768 = vmatprep.mubr.bf16.mxu0 %v56
    %1769 = vmatmul.mubr.bf16.gmra.mrb[0].mxu0 %v55
    %v1770 = vpop.f32.mrb[0].mxu0
    %v1771 = vadd.f32 %v1731, %v1770
    %v1772 = vpop.f32.mrb[0].mxu0
    %v1773 = vpop.f32.mrb[0].mxu0
    %v1774 = vpop.f32.mrb[0].mxu0
    %1775 = vdwg.mxu0
    %1776 = vmatprep.subr.bf16.mxu0 0
    %1777 = vmatpush1.bf16.msra.mxu0 %v1296
    %1778 = vmatprep.subr.bf16.mxu0 0
    %1779 = vmatpush1.bf16.msra.mxu0 %v1297
    %1780 = vmatprep.subr.bf16.mxu0 0
    %1781 = vmatpush1.bf16.msra.mxu0 %v1298
    %1782 = vmatprep.subr.bf16.mxu0 0
    %1783 = vmatpush1.bf16.msra.mxu0 %v1299
    %1784 = vmatprep.subr.bf16.mxu0 0
    %1785 = vmatpush1.bf16.msra.mxu0 %v1300
    %1786 = vmatprep.subr.bf16.mxu0 0
    %1787 = vmatpush1.bf16.msra.mxu0 %v1301
    %1788 = vmatprep.subr.bf16.mxu0 0
    %1789 = vmatpush1.bf16.msra.mxu0 %v1302
    %1790 = vmatprep.subr.bf16.mxu0 0
    %1791 = vmatpush1.bf16.msra.mxu0 %v1303
    %1792 = vmatprep.subr.bf16.mxu0 0
    %1793 = vmatpush1.bf16.msra.mxu0 %v1304
    %1794 = vmatprep.subr.bf16.mxu0 0
    %1795 = vmatpush1.bf16.msra.mxu0 %v1305
    %1796 = vmatprep.subr.bf16.mxu0 0
    %1797 = vmatpush1.bf16.msra.mxu0 %v1306
    %1798 = vmatprep.subr.bf16.mxu0 0
    %1799 = vmatpush1.bf16.msra.mxu0 %v1307
    %1800 = vmatprep.subr.bf16.mxu0 0
    %1801 = vmatpush1.bf16.msra.mxu0 %v1308
    %1802 = vmatprep.subr.bf16.mxu0 0
    %1803 = vmatpush1.bf16.msra.mxu0 %v1309
    %1804 = vmatprep.subr.bf16.mxu0 0
    %1805 = vmatpush1.bf16.msra.mxu0 %v1310
    %1806 = vmatprep.subr.bf16.mxu0 0
    %1807 = vmatpush1.bf16.msra.mxu0 %v1311
    %1808 = vmatprep.mubr.bf16.mxu0 %v58
    %1809 = vmatmul.mubr.bf16.gmra.mrb[0].mxu0 %v57
    %v1810 = vpop.f32.mrb[0].mxu0
    %v1811 = vadd.f32 %v1771, %v1810
    %v1812 = vpop.f32.mrb[0].mxu0
    %v1813 = vpop.f32.mrb[0].mxu0
    %v1814 = vpop.f32.mrb[0].mxu0
    %1815 = vdwg.mxu0
    %1816 = vmatprep.subr.bf16.mxu0 0
    %1817 = vmatpush1.bf16.msra.mxu0 %v1312
    %1818 = vmatprep.subr.bf16.mxu0 0
    %1819 = vmatpush1.bf16.msra.mxu0 %v1313
    %1820 = vmatprep.subr.bf16.mxu0 0
    %1821 = vmatpush1.bf16.msra.mxu0 %v1314
    %1822 = vmatprep.subr.bf16.mxu0 0
    %1823 = vmatpush1.bf16.msra.mxu0 %v1315
    %1824 = vmatprep.subr.bf16.mxu0 0
    %1825 = vmatpush1.bf16.msra.mxu0 %v1316
    %1826 = vmatprep.subr.bf16.mxu0 0
    %1827 = vmatpush1.bf16.msra.mxu0 %v1317
    %1828 = vmatprep.subr.bf16.mxu0 0
    %1829 = vmatpush1.bf16.msra.mxu0 %v1318
    %1830 = vmatprep.subr.bf16.mxu0 0
    %1831 = vmatpush1.bf16.msra.mxu0 %v1319
    %1832 = vmatprep.subr.bf16.mxu0 0
    %1833 = vmatpush1.bf16.msra.mxu0 %v1320
    %1834 = vmatprep.subr.bf16.mxu0 0
    %1835 = vmatpush1.bf16.msra.mxu0 %v1321
    %1836 = vmatprep.subr.bf16.mxu0 0
    %1837 = vmatpush1.bf16.msra.mxu0 %v1322
    %1838 = vmatprep.subr.bf16.mxu0 0
    %1839 = vmatpush1.bf16.msra.mxu0 %v1323
    %1840 = vmatprep.subr.bf16.mxu0 0
    %1841 = vmatpush1.bf16.msra.mxu0 %v1324
    %1842 = vmatprep.subr.bf16.mxu0 0
    %1843 = vmatpush1.bf16.msra.mxu0 %v1325
    %1844 = vmatprep.subr.bf16.mxu0 0
    %1845 = vmatpush1.bf16.msra.mxu0 %v1326
    %1846 = vmatprep.subr.bf16.mxu0 0
    %1847 = vmatpush1.bf16.msra.mxu0 %v1327
    %1848 = vmatprep.mubr.bf16.mxu0 %v60
    %1849 = vmatmul.mubr.bf16.gmra.mrb[0].mxu0 %v59
    %v1850 = vpop.f32.mrb[0].mxu0
    %v1851 = vadd.f32 %v1811, %v1850
    %v1852 = vpop.f32.mrb[0].mxu0
    %v1853 = vpop.f32.mrb[0].mxu0
    %v1854 = vpop.f32.mrb[0].mxu0
    %1855 = vdwg.mxu0
    %1856 = vmatprep.subr.bf16.mxu0 0
    %1857 = vmatpush1.bf16.msra.mxu0 %v1328
    %1858 = vmatprep.subr.bf16.mxu0 0
    %1859 = vmatpush1.bf16.msra.mxu0 %v1329
    %1860 = vmatprep.subr.bf16.mxu0 0
    %1861 = vmatpush1.bf16.msra.mxu0 %v1330
    %1862 = vmatprep.subr.bf16.mxu0 0
    %1863 = vmatpush1.bf16.msra.mxu0 %v1331
    %1864 = vmatprep.subr.bf16.mxu0 0
    %1865 = vmatpush1.bf16.msra.mxu0 %v1332
    %1866 = vmatprep.subr.bf16.mxu0 0
    %1867 = vmatpush1.bf16.msra.mxu0 %v1333
    %1868 = vmatprep.subr.bf16.mxu0 0
    %1869 = vmatpush1.bf16.msra.mxu0 %v1334
    %1870 = vmatprep.subr.bf16.mxu0 0
    %1871 = vmatpush1.bf16.msra.mxu0 %v1335
    %1872 = vmatprep.subr.bf16.mxu0 0
    %1873 = vmatpush1.bf16.msra.mxu0 %v1336
    %1874 = vmatprep.subr.bf16.mxu0 0
    %1875 = vmatpush1.bf16.msra.mxu0 %v1337
    %1876 = vmatprep.subr.bf16.mxu0 0
    %1877 = vmatpush1.bf16.msra.mxu0 %v1338
    %1878 = vmatprep.subr.bf16.mxu0 0
    %1879 = vmatpush1.bf16.msra.mxu0 %v1339
    %1880 = vmatprep.subr.bf16.mxu0 0
    %1881 = vmatpush1.bf16.msra.mxu0 %v1340
    %1882 = vmatprep.subr.bf16.mxu0 0
    %1883 = vmatpush1.bf16.msra.mxu0 %v1341
    %1884 = vmatprep.subr.bf16.mxu0 0
    %1885 = vmatpush1.bf16.msra.mxu0 %v1342
    %1886 = vmatprep.subr.bf16.mxu0 0
    %1887 = vmatpush1.bf16.msra.mxu0 %v1343
    %1888 = vmatprep.mubr.bf16.mxu0 %v62
    %1889 = vmatmul.mubr.bf16.gmra.mrb[0].mxu0 %v61
    %v1890 = vpop.f32.mrb[0].mxu0
    %v1891 = vadd.f32 %v1851, %v1890
    %v1892 = vpop.f32.mrb[0].mxu0
    %v1893 = vpop.f32.mrb[0].mxu0
    %v1894 = vpop.f32.mrb[0].mxu0
    %1895 = vdwg.mxu0
    %1896 = vmatprep.subr.bf16.mxu0 0
    %1897 = vmatpush1.bf16.msra.mxu0 %v1344
    %1898 = vmatprep.subr.bf16.mxu0 0
    %1899 = vmatpush1.bf16.msra.mxu0 %v1345
    %1900 = vmatprep.subr.bf16.mxu0 0
    %1901 = vmatpush1.bf16.msra.mxu0 %v1346
    %1902 = vmatprep.subr.bf16.mxu0 0
    %1903 = vmatpush1.bf16.msra.mxu0 %v1347
    %1904 = vmatprep.subr.bf16.mxu0 0
    %1905 = vmatpush1.bf16.msra.mxu0 %v1348
    %1906 = vmatprep.subr.bf16.mxu0 0
    %1907 = vmatpush1.bf16.msra.mxu0 %v1349
    %1908 = vmatprep.subr.bf16.mxu0 0
    %1909 = vmatpush1.bf16.msra.mxu0 %v1350
    %1910 = vmatprep.subr.bf16.mxu0 0
    %1911 = vmatpush1.bf16.msra.mxu0 %v1351
    %1912 = vmatprep.subr.bf16.mxu0 0
    %1913 = vmatpush1.bf16.msra.mxu0 %v1352
    %1914 = vmatprep.subr.bf16.mxu0 0
    %1915 = vmatpush1.bf16.msra.mxu0 %v1353
    %1916 = vmatprep.subr.bf16.mxu0 0
    %1917 = vmatpush1.bf16.msra.mxu0 %v1354
    %1918 = vmatprep.subr.bf16.mxu0 0
    %1919 = vmatpush1.bf16.msra.mxu0 %v1355
    %1920 = vmatprep.subr.bf16.mxu0 0
    %1921 = vmatpush1.bf16.msra.mxu0 %v1356
    %1922 = vmatprep.subr.bf16.mxu0 0
    %1923 = vmatpush1.bf16.msra.mxu0 %v1357
    %1924 = vmatprep.subr.bf16.mxu0 0
    %1925 = vmatpush1.bf16.msra.mxu0 %v1358
    %1926 = vmatprep.subr.bf16.mxu0 0
    %1927 = vmatpush1.bf16.msra.mxu0 %v1359
    %1928 = vmatprep.mubr.bf16.mxu0 %v64
    %1929 = vmatmul.mubr.bf16.gmra.mrb[0].mxu0 %v63
    %v1930 = vpop.f32.mrb[0].mxu0
    %v1931 = vadd.f32 %v1891, %v1930
    %v1932 = vpop.f32.mrb[0].mxu0
    %v1933 = vpop.f32.mrb[0].mxu0
    %v1934 = vpop.f32.mrb[0].mxu0
    %1935 = vdwg.mxu0
    %1936 = vmatprep.subr.bf16.mxu0 0
    %1937 = vmatpush1.bf16.msra.mxu0 %v1360
    %1938 = vmatprep.subr.bf16.mxu0 0
    %1939 = vmatpush1.bf16.msra.mxu0 %v1361
    %1940 = vmatprep.subr.bf16.mxu0 0
    %1941 = vmatpush1.bf16.msra.mxu0 %v1362
    %1942 = vmatprep.subr.bf16.mxu0 0
    %1943 = vmatpush1.bf16.msra.mxu0 %v1363
    %1944 = vmatprep.subr.bf16.mxu0 0
    %1945 = vmatpush1.bf16.msra.mxu0 %v1364
    %1946 = vmatprep.subr.bf16.mxu0 0
    %1947 = vmatpush1.bf16.msra.mxu0 %v1365
    %1948 = vmatprep.subr.bf16.mxu0 0
    %1949 = vmatpush1.bf16.msra.mxu0 %v1366
    %1950 = vmatprep.subr.bf16.mxu0 0
    %1951 = vmatpush1.bf16.msra.mxu0 %v1367
    %1952 = vmatprep.subr.bf16.mxu0 0
    %1953 = vmatpush1.bf16.msra.mxu0 %v1368
    %1954 = vmatprep.subr.bf16.mxu0 0
    %1955 = vmatpush1.bf16.msra.mxu0 %v1369
    %1956 = vmatprep.subr.bf16.mxu0 0
    %1957 = vmatpush1.bf16.msra.mxu0 %v1370
    %1958 = vmatprep.subr.bf16.mxu0 0
    %1959 = vmatpush1.bf16.msra.mxu0 %v1371
    %1960 = vmatprep.subr.bf16.mxu0 0
    %1961 = vmatpush1.bf16.msra.mxu0 %v1372
    %1962 = vmatprep.subr.bf16.mxu0 0
    %1963 = vmatpush1.bf16.msra.mxu0 %v1373
    %1964 = vmatprep.subr.bf16.mxu0 0
    %1965 = vmatpush1.bf16.msra.mxu0 %v1374
    %1966 = vmatprep.subr.bf16.mxu0 0
    %1967 = vmatpush1.bf16.msra.mxu0 %v1375
    %1968 = vmatprep.mubr.bf16.mxu0 %v66
    %1969 = vmatmul.mubr.bf16.gmra.mrb[0].mxu0 %v65
    %v1970 = vpop.f32.mrb[0].mxu0
    %v1971 = vadd.f32 %v1931, %v1970
    %v1972 = vpop.f32.mrb[0].mxu0
    %v1973 = vpop.f32.mrb[0].mxu0
    %v1974 = vpop.f32.mrb[0].mxu0
    %1975 = vdwg.mxu0
    %1976 = vmatprep.subr.bf16.mxu0 0
    %1977 = vmatpush1.bf16.msra.mxu0 %v1376
    %1978 = vmatprep.subr.bf16.mxu0 0
    %1979 = vmatpush1.bf16.msra.mxu0 %v1377
    %1980 = vmatprep.subr.bf16.mxu0 0
    %1981 = vmatpush1.bf16.msra.mxu0 %v1378
    %1982 = vmatprep.subr.bf16.mxu0 0
    %1983 = vmatpush1.bf16.msra.mxu0 %v1379
    %1984 = vmatprep.subr.bf16.mxu0 0
    %1985 = vmatpush1.bf16.msra.mxu0 %v1380
    %1986 = vmatprep.subr.bf16.mxu0 0
    %1987 = vmatpush1.bf16.msra.mxu0 %v1381
    %1988 = vmatprep.subr.bf16.mxu0 0
    %1989 = vmatpush1.bf16.msra.mxu0 %v1382
    %1990 = vmatprep.subr.bf16.mxu0 0
    %1991 = vmatpush1.bf16.msra.mxu0 %v1383
    %1992 = vmatprep.subr.bf16.mxu0 0
    %1993 = vmatpush1.bf16.msra.mxu0 %v1384
    %1994 = vmatprep.subr.bf16.mxu0 0
    %1995 = vmatpush1.bf16.msra.mxu0 %v1385
    %1996 = vmatprep.subr.bf16.mxu0 0
    %1997 = vmatpush1.bf16.msra.mxu0 %v1386
    %1998 = vmatprep.subr.bf16.mxu0 0
    %1999 = vmatpush1.bf16.msra.mxu0 %v1387
    %2000 = vmatprep.subr.bf16.mxu0 0
    %2001 = vmatpush1.bf16.msra.mxu0 %v1388
    %2002 = vmatprep.subr.bf16.mxu0 0
    %2003 = vmatpush1.bf16.msra.mxu0 %v1389
    %2004 = vmatprep.subr.bf16.mxu0 0
    %2005 = vmatpush1.bf16.msra.mxu0 %v1390
    %2006 = vmatprep.subr.bf16.mxu0 0
    %2007 = vmatpush1.bf16.msra.mxu0 %v1391
    %2008 = vmatprep.mubr.bf16.mxu0 %v68
    %2009 = vmatmul.mubr.bf16.gmra.mrb[0].mxu0 %v67
    %v2010 = vpop.f32.mrb[0].mxu0
    %v2011 = vadd.f32 %v1971, %v2010
    %v2012 = vpop.f32.mrb[0].mxu0
    %v2013 = vpop.f32.mrb[0].mxu0
    %v2014 = vpop.f32.mrb[0].mxu0
    %2015 = vdwg.mxu0
    %2016 = vmatprep.subr.bf16.mxu0 0
    %2017 = vmatpush1.bf16.msra.mxu0 %v1392
    %2018 = vmatprep.subr.bf16.mxu0 0
    %2019 = vmatpush1.bf16.msra.mxu0 %v1393
    %2020 = vmatprep.subr.bf16.mxu0 0
    %2021 = vmatpush1.bf16.msra.mxu0 %v1394
    %2022 = vmatprep.subr.bf16.mxu0 0
    %2023 = vmatpush1.bf16.msra.mxu0 %v1395
    %2024 = vmatprep.subr.bf16.mxu0 0
    %2025 = vmatpush1.bf16.msra.mxu0 %v1396
    %2026 = vmatprep.subr.bf16.mxu0 0
    %2027 = vmatpush1.bf16.msra.mxu0 %v1397
    %2028 = vmatprep.subr.bf16.mxu0 0
    %2029 = vmatpush1.bf16.msra.mxu0 %v1398
    %2030 = vmatprep.subr.bf16.mxu0 0
    %2031 = vmatpush1.bf16.msra.mxu0 %v1399
    %2032 = vmatprep.subr.bf16.mxu0 0
    %2033 = vmatpush1.bf16.msra.mxu0 %v1400
    %2034 = vmatprep.subr.bf16.mxu0 0
    %2035 = vmatpush1.bf16.msra.mxu0 %v1401
    %2036 = vmatprep.subr.bf16.mxu0 0
    %2037 = vmatpush1.bf16.msra.mxu0 %v1402
    %2038 = vmatprep.subr.bf16.mxu0 0
    %2039 = vmatpush1.bf16.msra.mxu0 %v1403
    %2040 = vmatprep.subr.bf16.mxu0 0
    %2041 = vmatpush1.bf16.msra.mxu0 %v1404
    %2042 = vmatprep.subr.bf16.mxu0 0
    %2043 = vmatpush1.bf16.msra.mxu0 %v1405
    %2044 = vmatprep.subr.bf16.mxu0 0
    %2045 = vmatpush1.bf16.msra.mxu0 %v1406
    %2046 = vmatprep.subr.bf16.mxu0 0
    %2047 = vmatpush1.bf16.msra.mxu0 %v1407
    %2048 = vmatprep.mubr.bf16.mxu0 %v70
    %2049 = vmatmul.mubr.bf16.gmra.mrb[0].mxu0 %v69
    %v2050 = vpop.f32.mrb[0].mxu0
    %v2051 = vadd.f32 %v2011, %v2050
    %v2052 = vpop.f32.mrb[0].mxu0
    %v2053 = vpop.f32.mrb[0].mxu0
    %v2054 = vpop.f32.mrb[0].mxu0
    %2055 = vdwg.mxu0
    %2056 = vmatprep.subr.bf16.mxu0 0
    %2057 = vmatpush1.bf16.msra.mxu0 %v1408
    %2058 = vmatprep.subr.bf16.mxu0 0
    %2059 = vmatpush1.bf16.msra.mxu0 %v1409
    %2060 = vmatprep.subr.bf16.mxu0 0
    %2061 = vmatpush1.bf16.msra.mxu0 %v1410
    %2062 = vmatprep.subr.bf16.mxu0 0
    %2063 = vmatpush1.bf16.msra.mxu0 %v1411
    %2064 = vmatprep.subr.bf16.mxu0 0
    %2065 = vmatpush1.bf16.msra.mxu0 %v1412
    %2066 = vmatprep.subr.bf16.mxu0 0
    %2067 = vmatpush1.bf16.msra.mxu0 %v1413
    %2068 = vmatprep.subr.bf16.mxu0 0
    %2069 = vmatpush1.bf16.msra.mxu0 %v1414
    %2070 = vmatprep.subr.bf16.mxu0 0
    %2071 = vmatpush1.bf16.msra.mxu0 %v1415
    %2072 = vmatprep.subr.bf16.mxu0 0
    %2073 = vmatpush1.bf16.msra.mxu0 %v1416
    %2074 = vmatprep.subr.bf16.mxu0 0
    %2075 = vmatpush1.bf16.msra.mxu0 %v1417
    %2076 = vmatprep.subr.bf16.mxu0 0
    %2077 = vmatpush1.bf16.msra.mxu0 %v1418
    %2078 = vmatprep.subr.bf16.mxu0 0
    %2079 = vmatpush1.bf16.msra.mxu0 %v1419
    %2080 = vmatprep.subr.bf16.mxu0 0
    %2081 = vmatpush1.bf16.msra.mxu0 %v1420
    %2082 = vmatprep.subr.bf16.mxu0 0
    %2083 = vmatpush1.bf16.msra.mxu0 %v1421
    %2084 = vmatprep.subr.bf16.mxu0 0
    %2085 = vmatpush1.bf16.msra.mxu0 %v1422
    %2086 = vmatprep.subr.bf16.mxu0 0
    %2087 = vmatpush1.bf16.msra.mxu0 %v1423
    %2088 = vmatprep.mubr.bf16.mxu0 %v72
    %2089 = vmatmul.mubr.bf16.gmra.mrb[0].mxu0 %v71
    %v2090 = vpop.f32.mrb[0].mxu0
    %v2091 = vadd.f32 %v2051, %v2090
    %v2092 = vpop.f32.mrb[0].mxu0
    %v2093 = vpop.f32.mrb[0].mxu0
    %v2094 = vpop.f32.mrb[0].mxu0
    %2095 = vdwg.mxu0
    %vm2096 = vcmask 64512
    %v2098 = vsel %vm2096, 1.0, 0
    %2100 = vmatprep.subr.mxu0 0.0
    %2101 = vmatpush1.msra.mxu0 %v2091
    %2102 = vmatprep.subr.mxu0 0.0
    %2103 = vmatpush1.msra.mxu0 0.0
    %2104 = vmatprep.subr.mxu0 0.0
    %2105 = vmatpush1.msra.mxu0 0.0
    %2106 = vmatprep.subr.mxu0 0.0
    %2107 = vmatpush1.msra.mxu0 0.0
    %2108 = vmatprep.subr.mxu0 0.0
    %2109 = vmatpush1.msra.mxu0 0.0
    %2110 = vmatprep.subr.mxu0 0.0
    %2111 = vmatpush1.msra.mxu0 0.0
    %2112 = vmatprep.subr.mxu0 0.0
    %2113 = vmatpush1.msra.mxu0 0.0
    %2114 = vmatprep.subr.mxu0 0.0
    %2115 = vmatpush1.msra.mxu0 0.0
    %2116 = vmatprep.subr.mxu0 0.0
    %2117 = vmatpush1.msra.mxu0 0.0
    %2118 = vmatprep.subr.mxu0 0.0
    %2119 = vmatpush1.msra.mxu0 0.0
    %2120 = vmatprep.subr.mxu0 0.0
    %2121 = vmatpush1.msra.mxu0 0.0
    %2122 = vmatprep.subr.mxu0 0.0
    %2123 = vmatpush1.msra.mxu0 0.0
    %2124 = vmatprep.subr.mxu0 0.0
    %2125 = vmatpush1.msra.mxu0 0.0
    %2126 = vmatprep.subr.mxu0 0.0
    %2127 = vmatpush1.msra.mxu0 0.0
    %2128 = vmatprep.subr.mxu0 0.0
    %2129 = vmatpush1.msra.mxu0 0.0
    %2130 = vmatprep.subr.mxu0 0.0
    %2131 = vmatpush1.msra.mxu0 0.0
    %2132 = vmatprep.subr.mxu0 0.0
    %2133 = vmatpush1.msra.mxu0 0.0
    %2134 = vmatprep.subr.mxu0 0.0
    %2135 = vmatpush1.msra.mxu0 0.0
    %2136 = vmatprep.subr.mxu0 0.0
    %2137 = vmatpush1.msra.mxu0 0.0
    %2138 = vmatprep.subr.mxu0 0.0
    %2139 = vmatpush1.msra.mxu0 0.0
    %2140 = vmatprep.subr.mxu0 0.0
    %2141 = vmatpush1.msra.mxu0 0.0
    %2142 = vmatprep.subr.mxu0 0.0
    %2143 = vmatpush1.msra.mxu0 0.0
    %2144 = vmatprep.subr.mxu0 0.0
    %2145 = vmatpush1.msra.mxu0 0.0
    %2146 = vmatprep.subr.mxu0 0.0
    %2147 = vmatpush1.msra.mxu0 0.0
    %2148 = vmatprep.subr.mxu0 0.0
    %2149 = vmatpush1.msra.mxu0 0.0
    %2150 = vmatprep.subr.mxu0 0.0
    %2151 = vmatpush1.msra.mxu0 0.0
    %2152 = vmatprep.subr.mxu0 0.0
    %2153 = vmatpush1.msra.mxu0 0.0
    %2154 = vmatprep.subr.mxu0 0.0
    %2155 = vmatpush1.msra.mxu0 0.0
    %2156 = vmatprep.subr.mxu0 0.0
    %2157 = vmatpush1.msra.mxu0 0.0
    %2158 = vmatprep.subr.mxu0 0.0
    %2159 = vmatpush1.msra.mxu0 0.0
    %2160 = vmatprep.subr.mxu0 0.0
    %2161 = vmatpush1.msra.mxu0 0.0
    %2162 = vmatprep.subr.mxu0 0.0
    %2163 = vmatpush1.msra.mxu0 0.0
    %2164 = vmatprep.mubr.f32.mxu0 0.0
    %2165 = vmatmul.mubr.f32.gmra.mrb[0].mxu0 %v2098
    %v2166 = vpop.f32.mrb[0].mxu0
    %v2167 = vadd.f32 0.0, %v2166
    %v2168 = vpop.f32.mrb[0].mxu0
    %2169 = vdwg.mxu0
    %v2170 = vmul.f32 %v2167, 0.125
    %v2171 = vld [vmem:[%s3] sm:$0xff]
    %v2172 = vld [vmem:[%s3 + $0x8] sm:$0xff]
    %v2173 = vld [vmem:[%s3 + $0x10] sm:$0xff]
    %v2174 = vld [vmem:[%s3 + $0x18] sm:$0xff]
    %v2175 = vld [vmem:[%s3 + $0x20] sm:$0xff]
    %v2176 = vld [vmem:[%s3 + $0x28] sm:$0xff]
    %v2177 = vld [vmem:[%s3 + $0x30] sm:$0xff]
    %v2178 = vld [vmem:[%s3 + $0x38] sm:$0xff]
    %v2179 = vld [vmem:[%s3 + $0x40] sm:$0xff]
    %v2180 = vld [vmem:[%s3 + $0x48] sm:$0xff]
    %v2181 = vld [vmem:[%s3 + $0x50] sm:$0xff]
    %v2182 = vld [vmem:[%s3 + $0x58] sm:$0xff]
    %v2183 = vld [vmem:[%s3 + $0x60] sm:$0xff]
    %v2184 = vld [vmem:[%s3 + $0x68] sm:$0xff]
    %v2185 = vld [vmem:[%s3 + $0x70] sm:$0xff]
    %v2186 = vld [vmem:[%s3 + $0x78] sm:$0xff]
    %2187 = vmatprep.subr.mxu0 0.0
    %2188 = vmatpush1.msra.mxu0 %v2171
    %2189 = vmatprep.subr.mxu0 0.0
    %2190 = vmatpush1.msra.mxu0 %v2172
    %2191 = vmatprep.subr.mxu0 0.0
    %2192 = vmatpush1.msra.mxu0 %v2173
    %2193 = vmatprep.subr.mxu0 0.0
    %2194 = vmatpush1.msra.mxu0 %v2174
    %2195 = vmatprep.subr.mxu0 0.0
    %2196 = vmatpush1.msra.mxu0 %v2175
    %2197 = vmatprep.subr.mxu0 0.0
    %2198 = vmatpush1.msra.mxu0 %v2176
    %2199 = vmatprep.subr.mxu0 0.0
    %2200 = vmatpush1.msra.mxu0 %v2177
    %2201 = vmatprep.subr.mxu0 0.0
    %2202 = vmatpush1.msra.mxu0 %v2178
    %2203 = vmatprep.subr.mxu0 0.0
    %2204 = vmatpush1.msra.mxu0 %v2179
    %2205 = vmatprep.subr.mxu0 0.0
    %2206 = vmatpush1.msra.mxu0 %v2180
    %2207 = vmatprep.subr.mxu0 0.0
    %2208 = vmatpush1.msra.mxu0 %v2181
    %2209 = vmatprep.subr.mxu0 0.0
    %2210 = vmatpush1.msra.mxu0 %v2182
    %2211 = vmatprep.subr.mxu0 0.0
    %2212 = vmatpush1.msra.mxu0 %v2183
    %2213 = vmatprep.subr.mxu0 0.0
    %2214 = vmatpush1.msra.mxu0 %v2184
    %2215 = vmatprep.subr.mxu0 0.0
    %2216 = vmatpush1.msra.mxu0 %v2185
    %2217 = vmatprep.subr.mxu0 0.0
    %2218 = vmatpush1.msra.mxu0 %v2186
    %2219 = vmatprep.subr.mxu0 0.0
    %2220 = vmatpush1.msra.mxu0 0.0
    %2221 = vmatprep.subr.mxu0 0.0
    %2222 = vmatpush1.msra.mxu0 0.0
    %2223 = vmatprep.subr.mxu0 0.0
    %2224 = vmatpush1.msra.mxu0 0.0
    %2225 = vmatprep.subr.mxu0 0.0
    %2226 = vmatpush1.msra.mxu0 0.0
    %2227 = vmatprep.subr.mxu0 0.0
    %2228 = vmatpush1.msra.mxu0 0.0
    %2229 = vmatprep.subr.mxu0 0.0
    %2230 = vmatpush1.msra.mxu0 0.0
    %2231 = vmatprep.subr.mxu0 0.0
    %2232 = vmatpush1.msra.mxu0 0.0
    %2233 = vmatprep.subr.mxu0 0.0
    %2234 = vmatpush1.msra.mxu0 0.0
    %2235 = vmatprep.subr.mxu0 0.0
    %2236 = vmatpush1.msra.mxu0 0.0
    %2237 = vmatprep.subr.mxu0 0.0
    %2238 = vmatpush1.msra.mxu0 0.0
    %2239 = vmatprep.subr.mxu0 0.0
    %2240 = vmatpush1.msra.mxu0 0.0
    %2241 = vmatprep.subr.mxu0 0.0
    %2242 = vmatpush1.msra.mxu0 0.0
    %2243 = vmatprep.subr.mxu0 0.0
    %2244 = vmatpush1.msra.mxu0 0.0
    %2245 = vmatprep.subr.mxu0 0.0
    %2246 = vmatpush1.msra.mxu0 0.0
    %2247 = vmatprep.subr.mxu0 0.0
    %2248 = vmatpush1.msra.mxu0 0.0
    %2249 = vmatprep.subr.mxu0 0.0
    %2250 = vmatpush1.msra.mxu0 0.0
    %2251 = vmatprep.mubr.f32.mxu0 0.0
    %2252 = vmatmul.mubr.f32.gmra.mrb[0].mxu0 %v2170
    %v2253 = vpop.f32.mrb[0].mxu0
    %v2254 = vadd.f32 0.0, %v2253
    %v2255 = vpop.f32.mrb[0].mxu0
    %2256 = vdwg.mxu0
    %v2257 = vmul.f32 %v2254, %v2254
    %vm2258 = vcmask 1040384
    %v2259 = vsel %vm2258, %v2257, 0.0
    %2260 = vadd.xlane.f32.xlu0 %v2259
    %v2261 = vpop.xlane.xlu0 %2260
    %v2262 = vadd.f32 %v2261, 1e-06
    %v2263 = vrsqrt.pop %v2262
    %v2264 = vmul.f32 %v2254, %v2263
    %2265 = vst [vmem:[#allocation2] sm:$0x1] %v2264
    %v2266 = vld [vmem:[%s4] sm:$0x1]
    %v2267 = vmul.f32 %v2264, %v2266
    %v2268 = vsel %vm2258, %v2267, 0.0
    %2269 = vadd.xlane.f32.xlu0 %v2268
    %v2270 = vpop.xlane.xlu0 %2269
    %vm2271 = vcmask 0
    %2272 = vst.msk [vmem:[#allocation4] sm:$0x1] %vm2271, %v2270
    // Predicated region
    $region22: #{clip_embed_forward.1} parent=1 // pred_check
      _
    $region23: #{clip_embed_forward.1} parent=1 // pred_check_branch
      %2274 = sbr.rel (0) target = $region25
    $region24: #{clip_embed_forward.1} parent=1 // pred_region
      %s2276 = ssub.s32 16, 16
      %2277 = vsyncadd [#allocation3], %s2276
      %s2279 = sshll.u32 [#allocation2], 4
      %s2280 = int_to_ptr.vmem [resolvable:$true] %s2279
      %2282 = dma.vmem_to_hbm [thread:$0]  %s2280, 16, %s5, [#allocation3]
    $region25: #{clip_embed_forward.1} parent=1 // pred_fallthru
      _
    // Predicated region
    $region26: #{clip_embed_forward.1} parent=1 // pred_check
      _
    $region27: #{clip_embed_forward.1} parent=1 // pred_check_branch
      %2284 = sbr.rel (0) target = $region29
    $region28: #{clip_embed_forward.1} parent=1 // pred_region
      %s2286 = ssub.s32 16, 16
      %2287 = vsyncadd [#allocation5], %s2286
      %s2289 = sshll.u32 [#allocation4], 4
      %s2290 = int_to_ptr.vmem [resolvable:$true] %s2289
      %2292 = dma.vmem_to_hbm [thread:$0]  %s2290, 16, %s6, [#allocation5]
    $region29: #{clip_embed_forward.1} parent=1 // pred_fallthru
      _
    // Predicated region
    $region30: #{clip_embed_forward.1} parent=1 // pred_check
      _
    $region31: #{clip_embed_forward.1} parent=1 // pred_check_branch
      %2294 = sbr.rel (0) target = $region33
    $region32: #{clip_embed_forward.1} parent=1 // pred_region
      %2295 = dma.done [#allocation3], 16
    $region33: #{clip_embed_forward.1} parent=1 // pred_fallthru
      _
    // Predicated region
    $region34: #{clip_embed_forward.1} parent=1 // pred_check
      _
    $region35: #{clip_embed_forward.1} parent=1 // pred_check_branch
      %2297 = sbr.rel (0) target = $region37
    $region36: #{clip_embed_forward.1} parent=1 // pred_region
      %2298 = dma.done [#allocation5], 16
    $region37: #{clip_embed_forward.1} parent=1 // pred_fallthru
      _
    %2299 = vsyncpa [#allocation3], 1
    %2300 = vsyncpa [#allocation5], 1

</llo_original>
